<compile_context>
chip_gen: v7x
topology: tpu7x:2x2x1
jax: 0.10.0
libtpu: 0.0.40
codegen_flags: <defaults>
</compile_context>

<pallas_src>
import jax
import jax.numpy as jnp
from jax.experimental import pallas as pl
from jax.experimental.pallas import tpu as pltpu


def rnn_mlp_kernel(x_ref, d_ref,
                   wih_ref, bih_ref, rhs_ref, w1last_ref,
                   w1d_ref, b1_ref, w2_ref, b2_ref, w3_ref, b3_ref,
                   o_ref):
    T, BT, D = x_ref.shape
    H2 = w1last_ref.shape[0]          # 2 * H (fused fwd|bwd state width)
    H = H2 // 2

    # ---- hoisted input projection: one (T*BT, D) @ (D, 2H) matmul, biases folded ----
    # (T, BT, D) -> (T*BT, D) is layout-preserving (BT = sublane tile multiple).
    x2 = x_ref[...].reshape(T * BT, D)
    xp = (jnp.dot(x2, wih_ref[...], preferred_element_type=jnp.float32)
          + bih_ref[...])                                      # (T*BT, 2H): [fwd | bwd]

    # Fused per-step inputs [fwd proj at time s | bwd proj at time T-1-s].
    # Independent of the recurrent state -> off the serial chain.
    xp_steps = [
        jnp.concatenate([xp[s * BT:(s + 1) * BT, :H],
                         xp[(T - 1 - s) * BT:(T - s) * BT, H:]], axis=1)
        for s in range(T)
    ]

    # ---- first dense layer: start from the d_input chunk + bias ----
    y1 = (jnp.dot(d_ref[...], w1d_ref[...], preferred_element_type=jnp.float32)
          + b1_ref[...])                                       # (BT, 2*ND)

    # ---- fused T-step recurrence; one 128-lane-wide matmul per serialized step ----
    h = jnp.tanh(xp_steps[0])                                  # step 0: prev state is 0
    for s in range(1, T):
        # rhs_ref[s-1] = [whh_blk | w1_steps[s-1]]  (2H, 2H + 2ND)
        r = jnp.dot(h, rhs_ref[s - 1], preferred_element_type=jnp.float32)
        y1 = y1 + r[:, H2:]                                    # Linear-1 contribution of h_{s-1}
        h = jnp.tanh(r[:, :H2] + xp_steps[s])                  # recurrence
    # Final state's Linear-1 contribution (off the serial chain).
    y1 = y1 + jnp.dot(h, w1last_ref[...], preferred_element_type=jnp.float32)

    # ---- ReLU -> Linear -> ReLU -> Linear ----
    y = jnp.maximum(y1, 0.0)
    y = jnp.maximum(jnp.dot(y, w2_ref[...], preferred_element_type=jnp.float32)
                    + b2_ref[...], 0.0)
    y = jnp.dot(y, w3_ref[...], preferred_element_type=jnp.float32) + b3_ref[...]
    o_ref[...] = y                                             # (BT, 1)


def prepare_params(params, T):
    """One-time parameter plumbing, hoisted out of the per-call path."""
    assert T >= 2
    H = params["whh_f"].shape[0]
    ND2 = params["b1"].shape[1]
    H2 = 2 * H

    wih = jnp.concatenate([params["wih_f"], params["wih_b"]], axis=1)      # (D, 2H)
    bih = jnp.concatenate([params["b_f"], params["b_b"]], axis=1)          # (1, 2H)

    whh = jnp.zeros((H2, H2), jnp.float32)                                 # block-diag
    whh = whh.at[:H, :H].set(params["whh_f"]).at[H:, H:].set(params["whh_b"])

    # Split w1 (rows ordered [fwd[0], bwd[0], ..., fwd[T-1], bwd[T-1], d]) into
    # per-step (2H, 2ND) chunks matching the fused state [fwd[s] | bwd[T-1-s]].
    w1 = params["w1"]
    w1_rnn = w1[:2 * T * H].reshape(T, 2, H, ND2)
    w1_steps = jnp.concatenate([w1_rnn[:, 0], w1_rnn[:, 1][::-1]], axis=1) # (T, 2H, 2ND)
    w1_d = w1[2 * T * H:]                                                  # (Dd, 2ND)

    # Fused per-step RHS: loop iter s multiplies h_{s-1} by [whh | w1_steps[s-1]].
    rhs_steps = jnp.concatenate(
        [jnp.broadcast_to(whh[None], (T - 1, H2, H2)), w1_steps[:T - 1]], axis=2)
    w1_last = w1_steps[T - 1]

    return dict(wih=wih, bih=bih, rhs_steps=rhs_steps, w1_last=w1_last,
                w1_d=w1_d, b1=params["b1"], w2=params["w2"], b2=params["b2"],
                w3=params["w3"], b3=params["b3"])


def rnn_model_forward(x, d, prepped, *, batch_tile=128):
    """Full forward pass; x: (B, T, D), d: (B, Dd), prepped from prepare_params."""
    B, T, D = x.shape
    BT = min(batch_tile, B)
    assert B % BT == 0 and BT % 8 == 0, "batch tile must divide B and be sublane-aligned"
    DD = d.shape[1]

    # Time-major layout so batch tiles are contiguous blocks per grid step.
    x_tbd = jnp.transpose(x, (1, 0, 2))                                    # (T, B, D)

    p = prepped
    weight_inputs = (p["wih"], p["bih"], p["rhs_steps"], p["w1_last"],
                     p["w1_d"], p["b1"], p["w2"], p["b2"], p["w3"], p["b3"])

    def const_spec(w):
        r = w.ndim
        return pl.BlockSpec(w.shape, lambda b, r=r: (0,) * r)   # VMEM-resident weights

    out = pl.pallas_call(
        rnn_mlp_kernel,
        out_shape=jax.ShapeDtypeStruct((B, 1), jnp.float32),
        grid=(B // BT,),
        in_specs=[pl.BlockSpec((T, BT, D), lambda b: (0, b, 0)),
                  pl.BlockSpec((BT, DD), lambda b: (b, 0))]
                 + [const_spec(w) for w in weight_inputs],
        out_specs=pl.BlockSpec((BT, 1), lambda b: (b, 0)),
        compiler_params=pltpu.CompilerParams(
            dimension_semantics=("parallel",),          # shards batch across TCs on v7x
            vmem_limit_bytes=32 * 1024 * 1024),
    )(x_tbd, d, *weight_inputs)
    return out[:, 0]  # squeeze(-1) -> (B,)


def init_params(key, T, D, H, num_dense, d_dim):
    """Deterministic parameter init (shapes follow the PyTorch module's __init__)."""
    ks = jax.random.split(key, 16)

    def unif(k, shape, fan_in):
        bound = 1.0 / jnp.sqrt(jnp.float32(fan_in))
        return jax.random.uniform(k, shape, jnp.float32, -bound, bound)

    # nn.RNN weights (PyTorch stores (H, in)); store transposed for x @ W.
    wih_f = unif(ks[0], (D, H), H)
    whh_f = unif(ks[1], (H, H), H)
    b_f = (unif(ks[2], (1, H), H) + unif(ks[3], (1, H), H))   # b_ih + b_hh
    wih_b = unif(ks[4], (D, H), H)
    whh_b = unif(ks[5], (H, H), H)
    b_b = (unif(ks[6], (1, H), H) + unif(ks[7], (1, H), H))

    # linear_relu_stack (bidirectional, no temporal attention):
    #   Linear(2*T*H + d_dim, 2*num_dense) -> ReLU -> Linear(2*nd, nd) -> ReLU -> Linear(nd, 1)
    f1_in = 2 * T * H + d_dim
    w1 = unif(ks[8], (f1_in, 2 * num_dense), f1_in)
    b1 = unif(ks[9], (1, 2 * num_dense), f1_in)
    w2 = unif(ks[10], (2 * num_dense, num_dense), 2 * num_dense)
    b2 = unif(ks[11], (1, num_dense), 2 * num_dense)
    w3 = unif(ks[12], (num_dense, 1), num_dense)
    b3 = unif(ks[13], (1, 1), num_dense)

    return dict(wih_f=wih_f, whh_f=whh_f, b_f=b_f,
                wih_b=wih_b, whh_b=whh_b, b_b=b_b,
                w1=w1, b1=b1, w2=w2, b2=b2, w3=w3, b3=b3)


def reference_forward(x, d, p):
    """Pure-JAX reference mirroring the PyTorch forward (for verification)."""
    B, T, D = x.shape
    H = p["whh_f"].shape[0]

    def scan_dir(wih, whh, b, xs):
        def step(h, xt):
            h = jnp.tanh(xt @ wih + h @ whh + b[0])
            return h, h
        _, hs = jax.lax.scan(step, jnp.zeros((B, H), jnp.float32),
                             jnp.transpose(xs, (1, 0, 2)))
        return jnp.transpose(hs, (1, 0, 2))   # (B, T, H)

    fwd = scan_dir(p["wih_f"], p["whh_f"], p["b_f"], x)
    bwd = scan_dir(p["wih_b"], p["whh_b"], p["b_b"], x[:, ::-1, :])[:, ::-1, :]
    rnn_out = jnp.concatenate([fwd, bwd], axis=-1)          # (B, T, 2H)
    flat = rnn_out.reshape(B, -1)
    feat = jnp.concatenate([flat, d], axis=1)
    y = jnp.maximum(feat @ p["w1"] + p["b1"], 0.0)
    y = jnp.maximum(y @ p["w2"] + p["b2"], 0.0)
    y = y @ p["w3"] + p["b3"]
    return y[:, 0]


if __name__ == "__main__":
    # Small shapes consistent with the module:
    #   X_input_shape = (T, D) = (8, 16), d_input_shape = (4,), num_filters = 32, num_dense = 32
    B, T, D, H, ND, DD = 8, 8, 16, 32, 32, 4

    key = jax.random.PRNGKey(0)
    kx, kd, kp = jax.random.split(key, 3)
    x = jax.random.normal(kx, (B, T, D), jnp.float32)
    d = jax.random.normal(kd, (B, DD), jnp.float32)
    params = init_params(kp, T, D, H, ND, DD)
    prepped = prepare_params(params, T)      # one-time plumbing, outside per-call path

    out = jax.block_until_ready(rnn_model_forward(x, d, prepped))
    ref = jax.block_until_ready(reference_forward(x, d, params))

    assert out.shape == (B,)
    assert jnp.allclose(out, ref, atol=1e-4, rtol=1e-4), (out, ref)
    print("KERNEL_OK")
</pallas_src>

<mosaic_0001>
module attributes {stable_mosaic.version = 11 : i64} {
  func.func @rnn_mlp_kernel(%arg0: i32, %arg1: memref<8x8x16xf32, #tpu.memory_space<vmem>>, %arg2: memref<8x4xf32, #tpu.memory_space<vmem>>, %arg3: memref<16x64xf32, #tpu.memory_space<vmem>>, %arg4: memref<1x64xf32, #tpu.memory_space<vmem>>, %arg5: memref<7x64x128xf32, #tpu.memory_space<vmem>>, %arg6: memref<64x64xf32, #tpu.memory_space<vmem>>, %arg7: memref<4x64xf32, #tpu.memory_space<vmem>>, %arg8: memref<1x64xf32, #tpu.memory_space<vmem>>, %arg9: memref<64x32xf32, #tpu.memory_space<vmem>>, %arg10: memref<1x32xf32, #tpu.memory_space<vmem>>, %arg11: memref<32x1xf32, #tpu.memory_space<vmem>>, %arg12: memref<1x1xf32, #tpu.memory_space<vmem>>, %arg13: memref<8x1xf32, #tpu.memory_space<vmem>>) attributes {dimension_semantics = [#tpu.dimension_semantics<parallel>], iteration_bounds = array<i64: 1>, scalar_prefetch = 0 : i64, scratch_operands = 0 : i64, tpu.core_type = #tpu.core_type<tc>, window_params = [{transform_indices = @transform_0, window_bounds = array<i64: 8, 8, 16>}, {transform_indices = @transform_1, window_bounds = array<i64: 8, 4>}, {pipeline_mode = #tpu.pipeline_mode<synchronous>, transform_indices = @transform_2, window_bounds = array<i64: 16, 64>}, {pipeline_mode = #tpu.pipeline_mode<synchronous>, transform_indices = @transform_3, window_bounds = array<i64: 1, 64>}, {pipeline_mode = #tpu.pipeline_mode<synchronous>, transform_indices = @transform_4, window_bounds = array<i64: 7, 64, 128>}, {pipeline_mode = #tpu.pipeline_mode<synchronous>, transform_indices = @transform_5, window_bounds = array<i64: 64, 64>}, {pipeline_mode = #tpu.pipeline_mode<synchronous>, transform_indices = @transform_6, window_bounds = array<i64: 4, 64>}, {pipeline_mode = #tpu.pipeline_mode<synchronous>, transform_indices = @transform_7, window_bounds = array<i64: 1, 64>}, {pipeline_mode = #tpu.pipeline_mode<synchronous>, transform_indices = @transform_8, window_bounds = array<i64: 64, 32>}, {pipeline_mode = #tpu.pipeline_mode<synchronous>, transform_indices = @transform_9, window_bounds = array<i64: 1, 32>}, {pipeline_mode = #tpu.pipeline_mode<synchronous>, transform_indices = @transform_10, window_bounds = array<i64: 32, 1>}, {pipeline_mode = #tpu.pipeline_mode<synchronous>, transform_indices = @transform_11, window_bounds = array<i64: 1, 1>}, {transform_indices = @transform_12, window_bounds = array<i64: 8, 1>}]} {
    %c0 = arith.constant 0 : index
    %c0_0 = arith.constant 0 : index
    %c0_1 = arith.constant 0 : index
    %0 = vector.load %arg1[%c0, %c0_0, %c0_1] : memref<8x8x16xf32, #tpu.memory_space<vmem>>, vector<8x8x16xf32>
    %1 = vector.shape_cast %0 : vector<8x8x16xf32> to vector<64x16xf32>
    %c0_2 = arith.constant 0 : index
    %c0_3 = arith.constant 0 : index
    %2 = vector.load %arg3[%c0_2, %c0_3] : memref<16x64xf32, #tpu.memory_space<vmem>>, vector<16x64xf32>
    %cst = arith.constant dense<0.000000e+00> : vector<64x64xf32>
    %3 = tpu.matmul %1, %2, %cst {dimension_numbers = #tpu.dot_dimension_numbers<[1], [0], [0], [1], [0, 0, 1, 1], [], []>} : vector<64x16xf32>, vector<16x64xf32>, vector<64x64xf32> -> vector<64x64xf32>
    %c0_4 = arith.constant 0 : index
    %c0_5 = arith.constant 0 : index
    %4 = vector.load %arg4[%c0_4, %c0_5] : memref<1x64xf32, #tpu.memory_space<vmem>>, vector<1x64xf32>
    %5 = vector.broadcast %4 : vector<1x64xf32> to vector<64x64xf32>
    %6 = arith.addf %3, %5 : vector<64x64xf32>
    %7 = vector.extract_strided_slice %6 {offsets = [0, 0], sizes = [8, 32], strides = [1, 1]} : vector<64x64xf32> to vector<8x32xf32>
    %8 = vector.extract_strided_slice %6 {offsets = [56, 32], sizes = [8, 32], strides = [1, 1]} : vector<64x64xf32> to vector<8x32xf32>
    %9 = tpu.concatenate %7, %8 in 1 : vector<8x32xf32>, vector<8x32xf32> -> vector<8x64xf32>
    %10 = vector.extract_strided_slice %6 {offsets = [8, 0], sizes = [8, 32], strides = [1, 1]} : vector<64x64xf32> to vector<8x32xf32>
    %11 = vector.extract_strided_slice %6 {offsets = [48, 32], sizes = [8, 32], strides = [1, 1]} : vector<64x64xf32> to vector<8x32xf32>
    %12 = tpu.concatenate %10, %11 in 1 : vector<8x32xf32>, vector<8x32xf32> -> vector<8x64xf32>
    %13 = vector.extract_strided_slice %6 {offsets = [16, 0], sizes = [8, 32], strides = [1, 1]} : vector<64x64xf32> to vector<8x32xf32>
    %14 = vector.extract_strided_slice %6 {offsets = [40, 32], sizes = [8, 32], strides = [1, 1]} : vector<64x64xf32> to vector<8x32xf32>
    %15 = tpu.concatenate %13, %14 in 1 : vector<8x32xf32>, vector<8x32xf32> -> vector<8x64xf32>
    %16 = vector.extract_strided_slice %6 {offsets = [24, 0], sizes = [8, 32], strides = [1, 1]} : vector<64x64xf32> to vector<8x32xf32>
    %17 = vector.extract_strided_slice %6 {offsets = [32, 32], sizes = [8, 32], strides = [1, 1]} : vector<64x64xf32> to vector<8x32xf32>
    %18 = tpu.concatenate %16, %17 in 1 : vector<8x32xf32>, vector<8x32xf32> -> vector<8x64xf32>
    %19 = vector.extract_strided_slice %6 {offsets = [32, 0], sizes = [8, 32], strides = [1, 1]} : vector<64x64xf32> to vector<8x32xf32>
    %20 = vector.extract_strided_slice %6 {offsets = [24, 32], sizes = [8, 32], strides = [1, 1]} : vector<64x64xf32> to vector<8x32xf32>
    %21 = tpu.concatenate %19, %20 in 1 : vector<8x32xf32>, vector<8x32xf32> -> vector<8x64xf32>
    %22 = vector.extract_strided_slice %6 {offsets = [40, 0], sizes = [8, 32], strides = [1, 1]} : vector<64x64xf32> to vector<8x32xf32>
    %23 = vector.extract_strided_slice %6 {offsets = [16, 32], sizes = [8, 32], strides = [1, 1]} : vector<64x64xf32> to vector<8x32xf32>
    %24 = tpu.concatenate %22, %23 in 1 : vector<8x32xf32>, vector<8x32xf32> -> vector<8x64xf32>
    %25 = vector.extract_strided_slice %6 {offsets = [48, 0], sizes = [8, 32], strides = [1, 1]} : vector<64x64xf32> to vector<8x32xf32>
    %26 = vector.extract_strided_slice %6 {offsets = [8, 32], sizes = [8, 32], strides = [1, 1]} : vector<64x64xf32> to vector<8x32xf32>
    %27 = tpu.concatenate %25, %26 in 1 : vector<8x32xf32>, vector<8x32xf32> -> vector<8x64xf32>
    %28 = vector.extract_strided_slice %6 {offsets = [56, 0], sizes = [8, 32], strides = [1, 1]} : vector<64x64xf32> to vector<8x32xf32>
    %29 = vector.extract_strided_slice %6 {offsets = [0, 32], sizes = [8, 32], strides = [1, 1]} : vector<64x64xf32> to vector<8x32xf32>
    %30 = tpu.concatenate %28, %29 in 1 : vector<8x32xf32>, vector<8x32xf32> -> vector<8x64xf32>
    %c0_6 = arith.constant 0 : index
    %c0_7 = arith.constant 0 : index
    %31 = vector.load %arg2[%c0_6, %c0_7] : memref<8x4xf32, #tpu.memory_space<vmem>>, vector<8x4xf32>
    %c0_8 = arith.constant 0 : index
    %c0_9 = arith.constant 0 : index
    %32 = vector.load %arg7[%c0_8, %c0_9] : memref<4x64xf32, #tpu.memory_space<vmem>>, vector<4x64xf32>
    %cst_10 = arith.constant dense<0.000000e+00> : vector<8x64xf32>
    %33 = tpu.matmul %31, %32, %cst_10 {dimension_numbers = #tpu.dot_dimension_numbers<[1], [0], [0], [1], [0, 0, 1, 1], [], []>} : vector<8x4xf32>, vector<4x64xf32>, vector<8x64xf32> -> vector<8x64xf32>
    %c0_11 = arith.constant 0 : index
    %c0_12 = arith.constant 0 : index
    %34 = vector.load %arg8[%c0_11, %c0_12] : memref<1x64xf32, #tpu.memory_space<vmem>>, vector<1x64xf32>
    %35 = vector.broadcast %34 : vector<1x64xf32> to vector<8x64xf32>
    %36 = arith.addf %33, %35 : vector<8x64xf32>
    %37 = math.tanh %9 : vector<8x64xf32>
    %c0_13 = arith.constant 0 : index
    %c0_14 = arith.constant 0 : index
    %c0_15 = arith.constant 0 : index
    %38 = vector.load %arg5[%c0_13, %c0_14, %c0_15] : memref<7x64x128xf32, #tpu.memory_space<vmem>>, vector<1x64x128xf32>
    %39 = vector.shape_cast %38 : vector<1x64x128xf32> to vector<64x128xf32>
    %cst_16 = arith.constant dense<0.000000e+00> : vector<8x128xf32>
    %40 = tpu.matmul %37, %39, %cst_16 {dimension_numbers = #tpu.dot_dimension_numbers<[1], [0], [0], [1], [0, 0, 1, 1], [], []>} : vector<8x64xf32>, vector<64x128xf32>, vector<8x128xf32> -> vector<8x128xf32>
    %41 = vector.extract_strided_slice %40 {offsets = [0, 64], sizes = [8, 64], strides = [1, 1]} : vector<8x128xf32> to vector<8x64xf32>
    %42 = arith.addf %36, %41 : vector<8x64xf32>
    %43 = vector.extract_strided_slice %40 {offsets = [0, 0], sizes = [8, 64], strides = [1, 1]} : vector<8x128xf32> to vector<8x64xf32>
    %44 = arith.addf %43, %12 : vector<8x64xf32>
    %45 = math.tanh %44 : vector<8x64xf32>
    %c1 = arith.constant 1 : index
    %c0_17 = arith.constant 0 : index
    %c0_18 = arith.constant 0 : index
    %46 = vector.load %arg5[%c1, %c0_17, %c0_18] : memref<7x64x128xf32, #tpu.memory_space<vmem>>, vector<1x64x128xf32>
    %47 = vector.shape_cast %46 : vector<1x64x128xf32> to vector<64x128xf32>
    %cst_19 = arith.constant dense<0.000000e+00> : vector<8x128xf32>
    %48 = tpu.matmul %45, %47, %cst_19 {dimension_numbers = #tpu.dot_dimension_numbers<[1], [0], [0], [1], [0, 0, 1, 1], [], []>} : vector<8x64xf32>, vector<64x128xf32>, vector<8x128xf32> -> vector<8x128xf32>
    %49 = vector.extract_strided_slice %48 {offsets = [0, 64], sizes = [8, 64], strides = [1, 1]} : vector<8x128xf32> to vector<8x64xf32>
    %50 = arith.addf %42, %49 : vector<8x64xf32>
    %51 = vector.extract_strided_slice %48 {offsets = [0, 0], sizes = [8, 64], strides = [1, 1]} : vector<8x128xf32> to vector<8x64xf32>
    %52 = arith.addf %51, %15 : vector<8x64xf32>
    %53 = math.tanh %52 : vector<8x64xf32>
    %c2 = arith.constant 2 : index
    %c0_20 = arith.constant 0 : index
    %c0_21 = arith.constant 0 : index
    %54 = vector.load %arg5[%c2, %c0_20, %c0_21] : memref<7x64x128xf32, #tpu.memory_space<vmem>>, vector<1x64x128xf32>
    %55 = vector.shape_cast %54 : vector<1x64x128xf32> to vector<64x128xf32>
    %cst_22 = arith.constant dense<0.000000e+00> : vector<8x128xf32>
    %56 = tpu.matmul %53, %55, %cst_22 {dimension_numbers = #tpu.dot_dimension_numbers<[1], [0], [0], [1], [0, 0, 1, 1], [], []>} : vector<8x64xf32>, vector<64x128xf32>, vector<8x128xf32> -> vector<8x128xf32>
    %57 = vector.extract_strided_slice %56 {offsets = [0, 64], sizes = [8, 64], strides = [1, 1]} : vector<8x128xf32> to vector<8x64xf32>
    %58 = arith.addf %50, %57 : vector<8x64xf32>
    %59 = vector.extract_strided_slice %56 {offsets = [0, 0], sizes = [8, 64], strides = [1, 1]} : vector<8x128xf32> to vector<8x64xf32>
    %60 = arith.addf %59, %18 : vector<8x64xf32>
    %61 = math.tanh %60 : vector<8x64xf32>
    %c3 = arith.constant 3 : index
    %c0_23 = arith.constant 0 : index
    %c0_24 = arith.constant 0 : index
    %62 = vector.load %arg5[%c3, %c0_23, %c0_24] : memref<7x64x128xf32, #tpu.memory_space<vmem>>, vector<1x64x128xf32>
    %63 = vector.shape_cast %62 : vector<1x64x128xf32> to vector<64x128xf32>
    %cst_25 = arith.constant dense<0.000000e+00> : vector<8x128xf32>
    %64 = tpu.matmul %61, %63, %cst_25 {dimension_numbers = #tpu.dot_dimension_numbers<[1], [0], [0], [1], [0, 0, 1, 1], [], []>} : vector<8x64xf32>, vector<64x128xf32>, vector<8x128xf32> -> vector<8x128xf32>
    %65 = vector.extract_strided_slice %64 {offsets = [0, 64], sizes = [8, 64], strides = [1, 1]} : vector<8x128xf32> to vector<8x64xf32>
    %66 = arith.addf %58, %65 : vector<8x64xf32>
    %67 = vector.extract_strided_slice %64 {offsets = [0, 0], sizes = [8, 64], strides = [1, 1]} : vector<8x128xf32> to vector<8x64xf32>
    %68 = arith.addf %67, %21 : vector<8x64xf32>
    %69 = math.tanh %68 : vector<8x64xf32>
    %c4 = arith.constant 4 : index
    %c0_26 = arith.constant 0 : index
    %c0_27 = arith.constant 0 : index
    %70 = vector.load %arg5[%c4, %c0_26, %c0_27] : memref<7x64x128xf32, #tpu.memory_space<vmem>>, vector<1x64x128xf32>
    %71 = vector.shape_cast %70 : vector<1x64x128xf32> to vector<64x128xf32>
    %cst_28 = arith.constant dense<0.000000e+00> : vector<8x128xf32>
    %72 = tpu.matmul %69, %71, %cst_28 {dimension_numbers = #tpu.dot_dimension_numbers<[1], [0], [0], [1], [0, 0, 1, 1], [], []>} : vector<8x64xf32>, vector<64x128xf32>, vector<8x128xf32> -> vector<8x128xf32>
    %73 = vector.extract_strided_slice %72 {offsets = [0, 64], sizes = [8, 64], strides = [1, 1]} : vector<8x128xf32> to vector<8x64xf32>
    %74 = arith.addf %66, %73 : vector<8x64xf32>
    %75 = vector.extract_strided_slice %72 {offsets = [0, 0], sizes = [8, 64], strides = [1, 1]} : vector<8x128xf32> to vector<8x64xf32>
    %76 = arith.addf %75, %24 : vector<8x64xf32>
    %77 = math.tanh %76 : vector<8x64xf32>
    %c5 = arith.constant 5 : index
    %c0_29 = arith.constant 0 : index
    %c0_30 = arith.constant 0 : index
    %78 = vector.load %arg5[%c5, %c0_29, %c0_30] : memref<7x64x128xf32, #tpu.memory_space<vmem>>, vector<1x64x128xf32>
    %79 = vector.shape_cast %78 : vector<1x64x128xf32> to vector<64x128xf32>
    %cst_31 = arith.constant dense<0.000000e+00> : vector<8x128xf32>
    %80 = tpu.matmul %77, %79, %cst_31 {dimension_numbers = #tpu.dot_dimension_numbers<[1], [0], [0], [1], [0, 0, 1, 1], [], []>} : vector<8x64xf32>, vector<64x128xf32>, vector<8x128xf32> -> vector<8x128xf32>
    %81 = vector.extract_strided_slice %80 {offsets = [0, 64], sizes = [8, 64], strides = [1, 1]} : vector<8x128xf32> to vector<8x64xf32>
    %82 = arith.addf %74, %81 : vector<8x64xf32>
    %83 = vector.extract_strided_slice %80 {offsets = [0, 0], sizes = [8, 64], strides = [1, 1]} : vector<8x128xf32> to vector<8x64xf32>
    %84 = arith.addf %83, %27 : vector<8x64xf32>
    %85 = math.tanh %84 : vector<8x64xf32>
    %c6 = arith.constant 6 : index
    %c0_32 = arith.constant 0 : index
    %c0_33 = arith.constant 0 : index
    %86 = vector.load %arg5[%c6, %c0_32, %c0_33] : memref<7x64x128xf32, #tpu.memory_space<vmem>>, vector<1x64x128xf32>
    %87 = vector.shape_cast %86 : vector<1x64x128xf32> to vector<64x128xf32>
    %cst_34 = arith.constant dense<0.000000e+00> : vector<8x128xf32>
    %88 = tpu.matmul %85, %87, %cst_34 {dimension_numbers = #tpu.dot_dimension_numbers<[1], [0], [0], [1], [0, 0, 1, 1], [], []>} : vector<8x64xf32>, vector<64x128xf32>, vector<8x128xf32> -> vector<8x128xf32>
    %89 = vector.extract_strided_slice %88 {offsets = [0, 64], sizes = [8, 64], strides = [1, 1]} : vector<8x128xf32> to vector<8x64xf32>
    %90 = arith.addf %82, %89 : vector<8x64xf32>
    %91 = vector.extract_strided_slice %88 {offsets = [0, 0], sizes = [8, 64], strides = [1, 1]} : vector<8x128xf32> to vector<8x64xf32>
    %92 = arith.addf %91, %30 : vector<8x64xf32>
    %93 = math.tanh %92 : vector<8x64xf32>
    %c0_35 = arith.constant 0 : index
    %c0_36 = arith.constant 0 : index
    %94 = vector.load %arg6[%c0_35, %c0_36] : memref<64x64xf32, #tpu.memory_space<vmem>>, vector<64x64xf32>
    %cst_37 = arith.constant dense<0.000000e+00> : vector<8x64xf32>
    %95 = tpu.matmul %93, %94, %cst_37 {dimension_numbers = #tpu.dot_dimension_numbers<[1], [0], [0], [1], [0, 0, 1, 1], [], []>} : vector<8x64xf32>, vector<64x64xf32>, vector<8x64xf32> -> vector<8x64xf32>
    %96 = arith.addf %90, %95 : vector<8x64xf32>
    %cst_38 = arith.constant 0.000000e+00 : f32
    %97 = vector.broadcast %cst_38 : f32 to vector<8x64xf32>
    %98 = arith.maximumf %96, %97 : vector<8x64xf32>
    %c0_39 = arith.constant 0 : index
    %c0_40 = arith.constant 0 : index
    %99 = vector.load %arg9[%c0_39, %c0_40] : memref<64x32xf32, #tpu.memory_space<vmem>>, vector<64x32xf32>
    %cst_41 = arith.constant dense<0.000000e+00> : vector<8x32xf32>
    %100 = tpu.matmul %98, %99, %cst_41 {dimension_numbers = #tpu.dot_dimension_numbers<[1], [0], [0], [1], [0, 0, 1, 1], [], []>} : vector<8x64xf32>, vector<64x32xf32>, vector<8x32xf32> -> vector<8x32xf32>
    %c0_42 = arith.constant 0 : index
    %c0_43 = arith.constant 0 : index
    %101 = vector.load %arg10[%c0_42, %c0_43] : memref<1x32xf32, #tpu.memory_space<vmem>>, vector<1x32xf32>
    %102 = vector.broadcast %101 : vector<1x32xf32> to vector<8x32xf32>
    %103 = arith.addf %100, %102 : vector<8x32xf32>
    %cst_44 = arith.constant 0.000000e+00 : f32
    %104 = vector.broadcast %cst_44 : f32 to vector<8x32xf32>
    %105 = arith.maximumf %103, %104 : vector<8x32xf32>
    %c0_45 = arith.constant 0 : index
    %c0_46 = arith.constant 0 : index
    %106 = vector.load %arg11[%c0_45, %c0_46] : memref<32x1xf32, #tpu.memory_space<vmem>>, vector<32x1xf32>
    %cst_47 = arith.constant dense<0.000000e+00> : vector<8x1xf32>
    %107 = tpu.matmul %105, %106, %cst_47 {dimension_numbers = #tpu.dot_dimension_numbers<[1], [0], [0], [1], [0, 0, 1, 1], [], []>} : vector<8x32xf32>, vector<32x1xf32>, vector<8x1xf32> -> vector<8x1xf32>
    %c0_48 = arith.constant 0 : index
    %c0_49 = arith.constant 0 : index
    %108 = vector.load %arg12[%c0_48, %c0_49] : memref<1x1xf32, #tpu.memory_space<vmem>>, vector<1x1xf32>
    %109 = vector.broadcast %108 : vector<1x1xf32> to vector<8x1xf32>
    %110 = arith.addf %107, %109 : vector<8x1xf32>
    %c0_50 = arith.constant 0 : index
    %c0_51 = arith.constant 0 : index
    %111 = vector.load %arg13[%c0_50, %c0_51] : memref<8x1xf32, #tpu.memory_space<vmem>>, vector<8x1xf32>
    tpu.vector_store %arg13[%c0_50, %c0_51], %110 {strides = array<i32>} : memref<8x1xf32, #tpu.memory_space<vmem>>, vector<8x1xf32>,
    return
  }
  func.func @transform_0(%arg0: i32) -> (i32, i32, i32) {
    %c0_i32 = arith.constant 0 : i32
    %c0_i32_0 = arith.constant 0 : i32
    %c0_i32_1 = arith.constant 0 : i32
    return %c0_i32, %arg0, %c0_i32_0 : i32, i32, i32
  }
  func.func @transform_1(%arg0: i32) -> (i32, i32) {
    %c0_i32 = arith.constant 0 : i32
    %c0_i32_0 = arith.constant 0 : i32
    return %arg0, %c0_i32 : i32, i32
  }
  func.func @transform_2(%arg0: i32) -> (i32, i32) {
    %c0_i32 = arith.constant 0 : i32
    %c0_i32_0 = arith.constant 0 : i32
    %c0_i32_1 = arith.constant 0 : i32
    return %c0_i32, %c0_i32_0 : i32, i32
  }
  func.func @transform_3(%arg0: i32) -> (i32, i32) {
    %c0_i32 = arith.constant 0 : i32
    %c0_i32_0 = arith.constant 0 : i32
    %c0_i32_1 = arith.constant 0 : i32
    return %c0_i32, %c0_i32_0 : i32, i32
  }
  func.func @transform_4(%arg0: i32) -> (i32, i32, i32) {
    %c0_i32 = arith.constant 0 : i32
    %c0_i32_0 = arith.constant 0 : i32
    %c0_i32_1 = arith.constant 0 : i32
    %c0_i32_2 = arith.constant 0 : i32
    return %c0_i32, %c0_i32_0, %c0_i32_1 : i32, i32, i32
  }
  func.func @transform_5(%arg0: i32) -> (i32, i32) {
    %c0_i32 = arith.constant 0 : i32
    %c0_i32_0 = arith.constant 0 : i32
    %c0_i32_1 = arith.constant 0 : i32
    return %c0_i32, %c0_i32_0 : i32, i32
  }
  func.func @transform_6(%arg0: i32) -> (i32, i32) {
    %c0_i32 = arith.constant 0 : i32
    %c0_i32_0 = arith.constant 0 : i32
    %c0_i32_1 = arith.constant 0 : i32
    return %c0_i32, %c0_i32_0 : i32, i32
  }
  func.func @transform_7(%arg0: i32) -> (i32, i32) {
    %c0_i32 = arith.constant 0 : i32
    %c0_i32_0 = arith.constant 0 : i32
    %c0_i32_1 = arith.constant 0 : i32
    return %c0_i32, %c0_i32_0 : i32, i32
  }
  func.func @transform_8(%arg0: i32) -> (i32, i32) {
    %c0_i32 = arith.constant 0 : i32
    %c0_i32_0 = arith.constant 0 : i32
    %c0_i32_1 = arith.constant 0 : i32
    return %c0_i32, %c0_i32_0 : i32, i32
  }
  func.func @transform_9(%arg0: i32) -> (i32, i32) {
    %c0_i32 = arith.constant 0 : i32
    %c0_i32_0 = arith.constant 0 : i32
    %c0_i32_1 = arith.constant 0 : i32
    return %c0_i32, %c0_i32_0 : i32, i32
  }
  func.func @transform_10(%arg0: i32) -> (i32, i32) {
    %c0_i32 = arith.constant 0 : i32
    %c0_i32_0 = arith.constant 0 : i32
    %c0_i32_1 = arith.constant 0 : i32
    return %c0_i32, %c0_i32_0 : i32, i32
  }
  func.func @transform_11(%arg0: i32) -> (i32, i32) {
    %c0_i32 = arith.constant 0 : i32
    %c0_i32_0 = arith.constant 0 : i32
    %c0_i32_1 = arith.constant 0 : i32
    return %c0_i32, %c0_i32_0 : i32, i32
  }
  func.func @transform_12(%arg0: i32) -> (i32, i32) {
    %c0_i32 = arith.constant 0 : i32
    %c0_i32_0 = arith.constant 0 : i32
    return %arg0, %c0_i32 : i32, i32
  }
}

</mosaic_0001>

<llo_original>
// kernel: tpu_custom_call.1
$region0: #{tpu_custom_call.1}
  #allocation0 [shape = 'u32[]', space=smem, size = 0x4, offset = 0x4, fixed_abs, tag = 'smem constant byte address 0x4 - core index']
  #allocation1 [shape = 'u32[144,128]{1,0:T(1,128)}', space=vmem, size = 0x12000, scoped, tag = 'internal scratch']
  #allocation2 [shape = 'f32[1,1]{1,0:T(1,128)S(1)}', space=vmem, size = 0x200, scoped, tag = 'scoped memory for tpu_custom_call.1']
  %s0 = inlined_call_operand.vmem [shape: f32[8,8,16], index: 0, kind: input, shape index: {}]
  %s1 = inlined_call_operand.vmem [shape: f32[8,4], index: 1, kind: input, shape index: {}]
  %s2 = inlined_call_operand.hbm [shape: f32[16,64], index: 2, kind: input, shape index: {}]
  %s3 = inlined_call_operand.vmem [shape: f32[1,64], index: 3, kind: input, shape index: {}]
  %s4 = inlined_call_operand.hbm [shape: f32[7,64,128], index: 4, kind: input, shape index: {}]
  %s5 = inlined_call_operand.vmem [shape: f32[64,64], index: 5, kind: input, shape index: {}]
  %s6 = inlined_call_operand.vmem [shape: f32[4,64], index: 6, kind: input, shape index: {}]
  %s7 = inlined_call_operand.vmem [shape: f32[1,64], index: 7, kind: input, shape index: {}]
  %s8 = inlined_call_operand.vmem [shape: f32[64,32], index: 8, kind: input, shape index: {}]
  %s9 = inlined_call_operand.vmem [shape: f32[1,32], index: 9, kind: input, shape index: {}]
  %s10 = inlined_call_operand.vmem [shape: f32[32,1], index: 10, kind: input, shape index: {}]
  %s11 = inlined_call_operand.<no memory space> [shape: f32[1,1], index: 11, kind: input, shape index: {}]
  %s12 = inlined_call_operand.vmem [shape: f32[8,1], index: 12, kind: output, shape index: {}]
  %s13 = sld [smem:[#allocation0]]
  $region66: #{tpu_custom_call.1} parent=0
    _
  %s15 = ssub.s32 1, %s13
  %s16 = scalar_select 0, %s15, %s13
  %v17 = vstv %s11
  %18 = vst [vmem:[#allocation2] sm:$0x1] %v17
  $region1: #{tpu_custom_call.1} parent=0
    #allocation3 [shape = 'u8[8192]{0}', space=vmem, size = 0x2000, scoped, tag = 'input window, operand 2, single buffered']
    #allocation4 [shape = 's32[1]{0}', space=sflag, size = 0x4, scoped, tag = 'scoped memory for tpu_custom_call.1']
    #allocation5 [shape = 'u8[229376]{0}', space=vmem, size = 0x38000, scoped, tag = 'input window, operand 4, single buffered']
    #allocation6 [shape = 's32[1]{0}', space=sflag, size = 0x4, scoped, tag = 'scoped memory for tpu_custom_call.1']
    %19 = vsyncpa [#allocation4], 0
    %20 = vsyncpa [#allocation6], 0
    // Predicated region
    $region2: #{tpu_custom_call.1} parent=1 // pred_check
      _
    $region3: #{tpu_custom_call.1} parent=1 // pred_check_branch
      %22 = sbr.rel (0) target = $region5
    $region4: #{tpu_custom_call.1} parent=1 // pred_region
      _
    $region5: #{tpu_custom_call.1} parent=1 // pred_fallthru
      _
    // Predicated region
    $region6: #{tpu_custom_call.1} parent=1 // pred_check
      _
    $region7: #{tpu_custom_call.1} parent=1 // pred_check_branch
      %24 = sbr.rel (0) target = $region9
    $region8: #{tpu_custom_call.1} parent=1 // pred_region
      _
    $region9: #{tpu_custom_call.1} parent=1 // pred_fallthru
      _
    // Predicated region
    $region10: #{tpu_custom_call.1} parent=1 // pred_check
      _
    $region11: #{tpu_custom_call.1} parent=1 // pred_check_branch
      %26 = sbr.rel (0) target = $region13
    $region12: #{tpu_custom_call.1} parent=1 // pred_region
      %s28 = ssub.s32 256, 256
      %29 = vsyncadd [#allocation4], %s28
      %s30 = sshll.u32 [#allocation3], 4
      %s31 = int_to_ptr.vmem [resolvable:$true] %s30
      %36 = dma.hbm_to_vmem [thread:$0]  %s2, 256, %s31, [#allocation4], 128, 128, 8
    $region13: #{tpu_custom_call.1} parent=1 // pred_fallthru
      _
    // Predicated region
    $region14: #{tpu_custom_call.1} parent=1 // pred_check
      _
    $region15: #{tpu_custom_call.1} parent=1 // pred_check_branch
      %38 = sbr.rel (0) target = $region17
    $region16: #{tpu_custom_call.1} parent=1 // pred_region
      _
    $region17: #{tpu_custom_call.1} parent=1 // pred_fallthru
      _
    // Predicated region
    $region18: #{tpu_custom_call.1} parent=1 // pred_check
      _
    $region19: #{tpu_custom_call.1} parent=1 // pred_check_branch
      %40 = sbr.rel (0) target = $region21
    $region20: #{tpu_custom_call.1} parent=1 // pred_region
      %s42 = ssub.s32 7168, 7168
      %43 = vsyncadd [#allocation6], %s42
      %s44 = sshll.u32 [#allocation5], 4
      %s45 = int_to_ptr.vmem [resolvable:$true] %s44
      %50 = dma.hbm_to_vmem [thread:$0]  %s4, 7168, %s45, [#allocation6], 128, 128, 8
    $region21: #{tpu_custom_call.1} parent=1 // pred_fallthru
      _
    // Predicated region
    $region22: #{tpu_custom_call.1} parent=1 // pred_check
      _
    $region23: #{tpu_custom_call.1} parent=1 // pred_check_branch
      %52 = sbr.rel (0) target = $region25
    $region24: #{tpu_custom_call.1} parent=1 // pred_region
      _
    $region25: #{tpu_custom_call.1} parent=1 // pred_fallthru
      _
    // Predicated region
    $region26: #{tpu_custom_call.1} parent=1 // pred_check
      _
    $region27: #{tpu_custom_call.1} parent=1 // pred_check_branch
      %54 = sbr.rel (0) target = $region29
    $region28: #{tpu_custom_call.1} parent=1 // pred_region
      _
    $region29: #{tpu_custom_call.1} parent=1 // pred_fallthru
      _
    // Predicated region
    $region30: #{tpu_custom_call.1} parent=1 // pred_check
      _
    $region31: #{tpu_custom_call.1} parent=1 // pred_check_branch
      %56 = sbr.rel (0) target = $region33
    $region32: #{tpu_custom_call.1} parent=1 // pred_region
      _
    $region33: #{tpu_custom_call.1} parent=1 // pred_fallthru
      _
    // Predicated region
    $region34: #{tpu_custom_call.1} parent=1 // pred_check
      _
    $region35: #{tpu_custom_call.1} parent=1 // pred_check_branch
      %58 = sbr.rel (0) target = $region37
    $region36: #{tpu_custom_call.1} parent=1 // pred_region
      _
    $region37: #{tpu_custom_call.1} parent=1 // pred_fallthru
      _
    // Predicated region
    $region38: #{tpu_custom_call.1} parent=1 // pred_check
      _
    $region39: #{tpu_custom_call.1} parent=1 // pred_check_branch
      %60 = sbr.rel (0) target = $region41
    $region40: #{tpu_custom_call.1} parent=1 // pred_region
      _
    $region41: #{tpu_custom_call.1} parent=1 // pred_fallthru
      _
    // Predicated region
    $region42: #{tpu_custom_call.1} parent=1 // pred_check
      _
    $region43: #{tpu_custom_call.1} parent=1 // pred_check_branch
      %62 = sbr.rel (0) target = $region45
    $region44: #{tpu_custom_call.1} parent=1 // pred_region
      _
    $region45: #{tpu_custom_call.1} parent=1 // pred_fallthru
      _
    // Predicated region
    $region46: #{tpu_custom_call.1} parent=1 // pred_check
      _
    $region47: #{tpu_custom_call.1} parent=1 // pred_check_branch
      %64 = sbr.rel (0) target = $region49
    $region48: #{tpu_custom_call.1} parent=1 // pred_region
      _
    $region49: #{tpu_custom_call.1} parent=1 // pred_fallthru
      _
    // Predicated region
    $region50: #{tpu_custom_call.1} parent=1 // pred_check
      _
    $region51: #{tpu_custom_call.1} parent=1 // pred_check_branch
      %66 = sbr.rel (0) target = $region53
    $region52: #{tpu_custom_call.1} parent=1 // pred_region
      %67 = dma.done [#allocation4], 256
    $region53: #{tpu_custom_call.1} parent=1 // pred_fallthru
      _
    // Predicated region
    $region54: #{tpu_custom_call.1} parent=1 // pred_check
      _
    $region55: #{tpu_custom_call.1} parent=1 // pred_check_branch
      %69 = sbr.rel (0) target = $region57
    $region56: #{tpu_custom_call.1} parent=1 // pred_region
      %70 = dma.done [#allocation6], 7168
    $region57: #{tpu_custom_call.1} parent=1 // pred_fallthru
      _
    %v71 = vld [vmem:[%s0] sm:$0xff]
    %v72 = vld [vmem:[%s0 + $0x8] sm:$0xff]
    %v73 = vld [vmem:[%s0 + $0x10] sm:$0xff]
    %v74 = vld [vmem:[%s0 + $0x18] sm:$0xff]
    %v75 = vld [vmem:[%s0 + $0x20] sm:$0xff]
    %v76 = vld [vmem:[%s0 + $0x28] sm:$0xff]
    %v77 = vld [vmem:[%s0 + $0x30] sm:$0xff]
    %v78 = vld [vmem:[%s0 + $0x38] sm:$0xff]
    %v79 = vld [vmem:[#allocation3] sm:$0xff]
    %v80 = vld [vmem:[#allocation3 + $0x8] sm:$0xff]
    %v81 = vld [vmem:[%s3] sm:$0x1]
    %v83 = vlaneseq
    %v84 = vshrl.u32 %v83, 7
    %v85 = vsub.s32 0, %v84
    %v86 = vrot.slane %v81, %v85
    %vm88 = vcmask 130048
    %v90 = vsel %vm88, %v71, 0
    %v93 = vsel %vm88, %v72, 0
    %v96 = vsel %vm88, %v73, 0
    %v99 = vsel %vm88, %v74, 0
    %v102 = vsel %vm88, %v75, 0
    %v105 = vsel %vm88, %v76, 0
    %v108 = vsel %vm88, %v77, 0
    %v111 = vsel %vm88, %v78, 0
    %113 = vmatprep.subr.mxu0 0.0
    %114 = vmatpush1.msra.mxu0 %v79
    %115 = vmatprep.subr.mxu0 0.0
    %116 = vmatpush1.msra.mxu0 %v80
    %117 = vmatprep.subr.mxu0 0.0
    %118 = vmatpush1.msra.mxu0 0.0
    %119 = vmatprep.subr.mxu0 0.0
    %120 = vmatpush1.msra.mxu0 0.0
    %121 = vmatprep.subr.mxu0 0.0
    %122 = vmatpush1.msra.mxu0 0.0
    %123 = vmatprep.subr.mxu0 0.0
    %124 = vmatpush1.msra.mxu0 0.0
    %125 = vmatprep.subr.mxu0 0.0
    %126 = vmatpush1.msra.mxu0 0.0
    %127 = vmatprep.subr.mxu0 0.0
    %128 = vmatpush1.msra.mxu0 0.0
    %129 = vmatprep.subr.mxu0 0.0
    %130 = vmatpush1.msra.mxu0 0.0
    %131 = vmatprep.subr.mxu0 0.0
    %132 = vmatpush1.msra.mxu0 0.0
    %133 = vmatprep.subr.mxu0 0.0
    %134 = vmatpush1.msra.mxu0 0.0
    %135 = vmatprep.subr.mxu0 0.0
    %136 = vmatpush1.msra.mxu0 0.0
    %137 = vmatprep.subr.mxu0 0.0
    %138 = vmatpush1.msra.mxu0 0.0
    %139 = vmatprep.subr.mxu0 0.0
    %140 = vmatpush1.msra.mxu0 0.0
    %141 = vmatprep.subr.mxu0 0.0
    %142 = vmatpush1.msra.mxu0 0.0
    %143 = vmatprep.subr.mxu0 0.0
    %144 = vmatpush1.msra.mxu0 0.0
    %145 = vmatprep.subr.mxu0 0.0
    %146 = vmatpush1.msra.mxu0 0.0
    %147 = vmatprep.subr.mxu0 0.0
    %148 = vmatpush1.msra.mxu0 0.0
    %149 = vmatprep.subr.mxu0 0.0
    %150 = vmatpush1.msra.mxu0 0.0
    %151 = vmatprep.subr.mxu0 0.0
    %152 = vmatpush1.msra.mxu0 0.0
    %153 = vmatprep.subr.mxu0 0.0
    %154 = vmatpush1.msra.mxu0 0.0
    %155 = vmatprep.subr.mxu0 0.0
    %156 = vmatpush1.msra.mxu0 0.0
    %157 = vmatprep.subr.mxu0 0.0
    %158 = vmatpush1.msra.mxu0 0.0
    %159 = vmatprep.subr.mxu0 0.0
    %160 = vmatpush1.msra.mxu0 0.0
    %161 = vmatprep.subr.mxu0 0.0
    %162 = vmatpush1.msra.mxu0 0.0
    %163 = vmatprep.subr.mxu0 0.0
    %164 = vmatpush1.msra.mxu0 0.0
    %165 = vmatprep.subr.mxu0 0.0
    %166 = vmatpush1.msra.mxu0 0.0
    %167 = vmatprep.subr.mxu0 0.0
    %168 = vmatpush1.msra.mxu0 0.0
    %169 = vmatprep.subr.mxu0 0.0
    %170 = vmatpush1.msra.mxu0 0.0
    %171 = vmatprep.subr.mxu0 0.0
    %172 = vmatpush1.msra.mxu0 0.0
    %173 = vmatprep.subr.mxu0 0.0
    %174 = vmatpush1.msra.mxu0 0.0
    %175 = vmatprep.subr.mxu0 0.0
    %176 = vmatpush1.msra.mxu0 0.0
    %177 = vmatprep.mubr.f32.mxu0 0.0
    %178 = vmatmul.mubr.f32.gmra.mrb[0].mxu0 %v90
    %v179 = vpop.f32.mrb[0].mxu0
    %v180 = vadd.f32 %v86, %v179
    %v181 = vpop.f32.mrb[0].mxu0
    %182 = vmatprep.mubr.f32.mxu0 0.0
    %183 = vmatmul.mubr.f32.gmra.mrb[0].mxu0 %v93
    %v184 = vpop.f32.mrb[0].mxu0
    %v185 = vadd.f32 %v86, %v184
    %v186 = vpop.f32.mrb[0].mxu0
    %187 = vmatprep.mubr.f32.mxu0 0.0
    %188 = vmatmul.mubr.f32.gmra.mrb[0].mxu0 %v96
    %v189 = vpop.f32.mrb[0].mxu0
    %v190 = vadd.f32 %v86, %v189
    %v191 = vpop.f32.mrb[0].mxu0
    %192 = vmatprep.mubr.f32.mxu0 0.0
    %193 = vmatmul.mubr.f32.gmra.mrb[0].mxu0 %v99
    %v194 = vpop.f32.mrb[0].mxu0
    %v195 = vadd.f32 %v86, %v194
    %v196 = vpop.f32.mrb[0].mxu0
    %197 = vmatprep.mubr.f32.mxu0 0.0
    %198 = vmatmul.mubr.f32.gmra.mrb[0].mxu0 %v102
    %v199 = vpop.f32.mrb[0].mxu0
    %v200 = vadd.f32 %v86, %v199
    %v201 = vpop.f32.mrb[0].mxu0
    %202 = vmatprep.mubr.f32.mxu0 0.0
    %203 = vmatmul.mubr.f32.gmra.mrb[0].mxu0 %v105
    %v204 = vpop.f32.mrb[0].mxu0
    %v205 = vadd.f32 %v86, %v204
    %v206 = vpop.f32.mrb[0].mxu0
    %207 = vmatprep.mubr.f32.mxu0 0.0
    %208 = vmatmul.mubr.f32.gmra.mrb[0].mxu0 %v108
    %v209 = vpop.f32.mrb[0].mxu0
    %v210 = vadd.f32 %v86, %v209
    %v211 = vpop.f32.mrb[0].mxu0
    %212 = vmatprep.mubr.f32.mxu0 0.0
    %213 = vmatmul.mubr.f32.gmra.mrb[0].mxu0 %v111
    %v214 = vpop.f32.mrb[0].mxu0
    %v215 = vadd.f32 %v86, %v214
    %v216 = vpop.f32.mrb[0].mxu0
    %217 = vdwg.mxu0
    %vm218 = vcmask 261120
    %v219 = vsel %vm218, %v180, %v215
    %v220 = vsel %vm218, %v185, %v210
    %v221 = vsel %vm218, %v190, %v205
    %v222 = vsel %vm218, %v195, %v200
    %v223 = vsel %vm218, %v200, %v195
    %v224 = vsel %vm218, %v205, %v190
    %v225 = vsel %vm218, %v210, %v185
    %v226 = vsel %vm218, %v215, %v180
    %v227 = vld [vmem:[%s1] sm:$0xff]
    %v228 = vld [vmem:[%s6] sm:$0xf]
    %v229 = vld [vmem:[%s7] sm:$0x1]
    %v231 = vlaneseq
    %v232 = vshrl.u32 %v231, 7
    %v233 = vsub.s32 0, %v232
    %v234 = vrot.slane %v229, %v233
    %vm236 = vcmask 31744
    %v238 = vsel %vm236, %v227, 0
    %vm240 = vcmask 1043456
    %v242 = vsel %vm240, %v228, 0
    %244 = vmatprep.subr.mxu0 0.0
    %245 = vmatpush1.msra.mxu0 %v242
    %246 = vmatprep.subr.mxu0 0.0
    %247 = vmatpush1.msra.mxu0 0.0
    %248 = vmatprep.subr.mxu0 0.0
    %249 = vmatpush1.msra.mxu0 0.0
    %250 = vmatprep.subr.mxu0 0.0
    %251 = vmatpush1.msra.mxu0 0.0
    %252 = vmatprep.subr.mxu0 0.0
    %253 = vmatpush1.msra.mxu0 0.0
    %254 = vmatprep.subr.mxu0 0.0
    %255 = vmatpush1.msra.mxu0 0.0
    %256 = vmatprep.subr.mxu0 0.0
    %257 = vmatpush1.msra.mxu0 0.0
    %258 = vmatprep.subr.mxu0 0.0
    %259 = vmatpush1.msra.mxu0 0.0
    %260 = vmatprep.subr.mxu0 0.0
    %261 = vmatpush1.msra.mxu0 0.0
    %262 = vmatprep.subr.mxu0 0.0
    %263 = vmatpush1.msra.mxu0 0.0
    %264 = vmatprep.subr.mxu0 0.0
    %265 = vmatpush1.msra.mxu0 0.0
    %266 = vmatprep.subr.mxu0 0.0
    %267 = vmatpush1.msra.mxu0 0.0
    %268 = vmatprep.subr.mxu0 0.0
    %269 = vmatpush1.msra.mxu0 0.0
    %270 = vmatprep.subr.mxu0 0.0
    %271 = vmatpush1.msra.mxu0 0.0
    %272 = vmatprep.subr.mxu0 0.0
    %273 = vmatpush1.msra.mxu0 0.0
    %274 = vmatprep.subr.mxu0 0.0
    %275 = vmatpush1.msra.mxu0 0.0
    %276 = vmatprep.subr.mxu0 0.0
    %277 = vmatpush1.msra.mxu0 0.0
    %278 = vmatprep.subr.mxu0 0.0
    %279 = vmatpush1.msra.mxu0 0.0
    %280 = vmatprep.subr.mxu0 0.0
    %281 = vmatpush1.msra.mxu0 0.0
    %282 = vmatprep.subr.mxu0 0.0
    %283 = vmatpush1.msra.mxu0 0.0
    %284 = vmatprep.subr.mxu0 0.0
    %285 = vmatpush1.msra.mxu0 0.0
    %286 = vmatprep.subr.mxu0 0.0
    %287 = vmatpush1.msra.mxu0 0.0
    %288 = vmatprep.subr.mxu0 0.0
    %289 = vmatpush1.msra.mxu0 0.0
    %290 = vmatprep.subr.mxu0 0.0
    %291 = vmatpush1.msra.mxu0 0.0
    %292 = vmatprep.subr.mxu0 0.0
    %293 = vmatpush1.msra.mxu0 0.0
    %294 = vmatprep.subr.mxu0 0.0
    %295 = vmatpush1.msra.mxu0 0.0
    %296 = vmatprep.subr.mxu0 0.0
    %297 = vmatpush1.msra.mxu0 0.0
    %298 = vmatprep.subr.mxu0 0.0
    %299 = vmatpush1.msra.mxu0 0.0
    %300 = vmatprep.subr.mxu0 0.0
    %301 = vmatpush1.msra.mxu0 0.0
    %302 = vmatprep.subr.mxu0 0.0
    %303 = vmatpush1.msra.mxu0 0.0
    %304 = vmatprep.subr.mxu0 0.0
    %305 = vmatpush1.msra.mxu0 0.0
    %306 = vmatprep.subr.mxu0 0.0
    %307 = vmatpush1.msra.mxu0 0.0
    %308 = vmatprep.mubr.f32.mxu0 0.0
    %309 = vmatmul.mubr.f32.gmra.mrb[0].mxu0 %v238
    %v310 = vpop.f32.mrb[0].mxu0
    %v311 = vadd.f32 %v234, %v310
    %v312 = vpop.f32.mrb[0].mxu0
    %313 = vdwg.mxu0
    %v314 = vtanh.pop %v219
    %v315 = vld [vmem:[#allocation5] sm:$0xff]
    %v316 = vld [vmem:[#allocation5 + $0x8] sm:$0xff]
    %v317 = vld [vmem:[#allocation5 + $0x10] sm:$0xff]
    %v318 = vld [vmem:[#allocation5 + $0x18] sm:$0xff]
    %v319 = vld [vmem:[#allocation5 + $0x20] sm:$0xff]
    %v320 = vld [vmem:[#allocation5 + $0x28] sm:$0xff]
    %v321 = vld [vmem:[#allocation5 + $0x30] sm:$0xff]
    %v322 = vld [vmem:[#allocation5 + $0x38] sm:$0xff]
    %vm323 = vcmask 523264
    %v325 = vsel %vm323, %v314, 0
    %327 = vmatprep.subr.mxu0 0.0
    %328 = vmatpush1.msra.mxu0 %v315
    %329 = vmatprep.subr.mxu0 0.0
    %330 = vmatpush1.msra.mxu0 %v316
    %331 = vmatprep.subr.mxu0 0.0
    %332 = vmatpush1.msra.mxu0 %v317
    %333 = vmatprep.subr.mxu0 0.0
    %334 = vmatpush1.msra.mxu0 %v318
    %335 = vmatprep.subr.mxu0 0.0
    %336 = vmatpush1.msra.mxu0 %v319
    %337 = vmatprep.subr.mxu0 0.0
    %338 = vmatpush1.msra.mxu0 %v320
    %339 = vmatprep.subr.mxu0 0.0
    %340 = vmatpush1.msra.mxu0 %v321
    %341 = vmatprep.subr.mxu0 0.0
    %342 = vmatpush1.msra.mxu0 %v322
    %343 = vmatprep.subr.mxu0 0.0
    %344 = vmatpush1.msra.mxu0 0.0
    %345 = vmatprep.subr.mxu0 0.0
    %346 = vmatpush1.msra.mxu0 0.0
    %347 = vmatprep.subr.mxu0 0.0
    %348 = vmatpush1.msra.mxu0 0.0
    %349 = vmatprep.subr.mxu0 0.0
    %350 = vmatpush1.msra.mxu0 0.0
    %351 = vmatprep.subr.mxu0 0.0
    %352 = vmatpush1.msra.mxu0 0.0
    %353 = vmatprep.subr.mxu0 0.0
    %354 = vmatpush1.msra.mxu0 0.0
    %355 = vmatprep.subr.mxu0 0.0
    %356 = vmatpush1.msra.mxu0 0.0
    %357 = vmatprep.subr.mxu0 0.0
    %358 = vmatpush1.msra.mxu0 0.0
    %359 = vmatprep.subr.mxu0 0.0
    %360 = vmatpush1.msra.mxu0 0.0
    %361 = vmatprep.subr.mxu0 0.0
    %362 = vmatpush1.msra.mxu0 0.0
    %363 = vmatprep.subr.mxu0 0.0
    %364 = vmatpush1.msra.mxu0 0.0
    %365 = vmatprep.subr.mxu0 0.0
    %366 = vmatpush1.msra.mxu0 0.0
    %367 = vmatprep.subr.mxu0 0.0
    %368 = vmatpush1.msra.mxu0 0.0
    %369 = vmatprep.subr.mxu0 0.0
    %370 = vmatpush1.msra.mxu0 0.0
    %371 = vmatprep.subr.mxu0 0.0
    %372 = vmatpush1.msra.mxu0 0.0
    %373 = vmatprep.subr.mxu0 0.0
    %374 = vmatpush1.msra.mxu0 0.0
    %375 = vmatprep.subr.mxu0 0.0
    %376 = vmatpush1.msra.mxu0 0.0
    %377 = vmatprep.subr.mxu0 0.0
    %378 = vmatpush1.msra.mxu0 0.0
    %379 = vmatprep.subr.mxu0 0.0
    %380 = vmatpush1.msra.mxu0 0.0
    %381 = vmatprep.subr.mxu0 0.0
    %382 = vmatpush1.msra.mxu0 0.0
    %383 = vmatprep.subr.mxu0 0.0
    %384 = vmatpush1.msra.mxu0 0.0
    %385 = vmatprep.subr.mxu0 0.0
    %386 = vmatpush1.msra.mxu0 0.0
    %387 = vmatprep.subr.mxu0 0.0
    %388 = vmatpush1.msra.mxu0 0.0
    %389 = vmatprep.subr.mxu0 0.0
    %390 = vmatpush1.msra.mxu0 0.0
    %391 = vmatprep.mubr.f32.mxu0 0.0
    %392 = vmatmul.mubr.f32.gmra.mrb[0].mxu0 %v325
    %v393 = vpop.f32.mrb[0].mxu0
    %v394 = vadd.f32 0.0, %v393
    %v395 = vpop.f32.mrb[0].mxu0
    %396 = vdwg.mxu0
    %398 = vrot.lane.b32.xlu0 %v394, 64
    %v399 = vpop.permute.xlu0 %398
    %v401 = vadd.f32 %v311, %v399
    %v402 = vadd.f32 %v394, %v220
    %v403 = vtanh.pop %v402
    %s404 = scalar_lea.vmem [#allocation5], 64
    %v405 = vld [vmem:[%s404] sm:$0xff]
    %v406 = vld [vmem:[%s404 + $0x8] sm:$0xff]
    %v407 = vld [vmem:[%s404 + $0x10] sm:$0xff]
    %v408 = vld [vmem:[%s404 + $0x18] sm:$0xff]
    %v409 = vld [vmem:[%s404 + $0x20] sm:$0xff]
    %v410 = vld [vmem:[%s404 + $0x28] sm:$0xff]
    %v411 = vld [vmem:[%s404 + $0x30] sm:$0xff]
    %v412 = vld [vmem:[%s404 + $0x38] sm:$0xff]
    %v414 = vsel %vm323, %v403, 0
    %416 = vmatprep.subr.mxu0 0.0
    %417 = vmatpush1.msra.mxu0 %v405
    %418 = vmatprep.subr.mxu0 0.0
    %419 = vmatpush1.msra.mxu0 %v406
    %420 = vmatprep.subr.mxu0 0.0
    %421 = vmatpush1.msra.mxu0 %v407
    %422 = vmatprep.subr.mxu0 0.0
    %423 = vmatpush1.msra.mxu0 %v408
    %424 = vmatprep.subr.mxu0 0.0
    %425 = vmatpush1.msra.mxu0 %v409
    %426 = vmatprep.subr.mxu0 0.0
    %427 = vmatpush1.msra.mxu0 %v410
    %428 = vmatprep.subr.mxu0 0.0
    %429 = vmatpush1.msra.mxu0 %v411
    %430 = vmatprep.subr.mxu0 0.0
    %431 = vmatpush1.msra.mxu0 %v412
    %432 = vmatprep.subr.mxu0 0.0
    %433 = vmatpush1.msra.mxu0 0.0
    %434 = vmatprep.subr.mxu0 0.0
    %435 = vmatpush1.msra.mxu0 0.0
    %436 = vmatprep.subr.mxu0 0.0
    %437 = vmatpush1.msra.mxu0 0.0
    %438 = vmatprep.subr.mxu0 0.0
    %439 = vmatpush1.msra.mxu0 0.0
    %440 = vmatprep.subr.mxu0 0.0
    %441 = vmatpush1.msra.mxu0 0.0
    %442 = vmatprep.subr.mxu0 0.0
    %443 = vmatpush1.msra.mxu0 0.0
    %444 = vmatprep.subr.mxu0 0.0
    %445 = vmatpush1.msra.mxu0 0.0
    %446 = vmatprep.subr.mxu0 0.0
    %447 = vmatpush1.msra.mxu0 0.0
    %448 = vmatprep.subr.mxu0 0.0
    %449 = vmatpush1.msra.mxu0 0.0
    %450 = vmatprep.subr.mxu0 0.0
    %451 = vmatpush1.msra.mxu0 0.0
    %452 = vmatprep.subr.mxu0 0.0
    %453 = vmatpush1.msra.mxu0 0.0
    %454 = vmatprep.subr.mxu0 0.0
    %455 = vmatpush1.msra.mxu0 0.0
    %456 = vmatprep.subr.mxu0 0.0
    %457 = vmatpush1.msra.mxu0 0.0
    %458 = vmatprep.subr.mxu0 0.0
    %459 = vmatpush1.msra.mxu0 0.0
    %460 = vmatprep.subr.mxu0 0.0
    %461 = vmatpush1.msra.mxu0 0.0
    %462 = vmatprep.subr.mxu0 0.0
    %463 = vmatpush1.msra.mxu0 0.0
    %464 = vmatprep.subr.mxu0 0.0
    %465 = vmatpush1.msra.mxu0 0.0
    %466 = vmatprep.subr.mxu0 0.0
    %467 = vmatpush1.msra.mxu0 0.0
    %468 = vmatprep.subr.mxu0 0.0
    %469 = vmatpush1.msra.mxu0 0.0
    %470 = vmatprep.subr.mxu0 0.0
    %471 = vmatpush1.msra.mxu0 0.0
    %472 = vmatprep.subr.mxu0 0.0
    %473 = vmatpush1.msra.mxu0 0.0
    %474 = vmatprep.subr.mxu0 0.0
    %475 = vmatpush1.msra.mxu0 0.0
    %476 = vmatprep.subr.mxu0 0.0
    %477 = vmatpush1.msra.mxu0 0.0
    %478 = vmatprep.subr.mxu0 0.0
    %479 = vmatpush1.msra.mxu0 0.0
    %480 = vmatprep.mubr.f32.mxu0 0.0
    %481 = vmatmul.mubr.f32.gmra.mrb[0].mxu0 %v414
    %v482 = vpop.f32.mrb[0].mxu0
    %v483 = vadd.f32 0.0, %v482
    %v484 = vpop.f32.mrb[0].mxu0
    %485 = vdwg.mxu0
    %487 = vrot.lane.b32.xlu0 %v483, 64
    %v488 = vpop.permute.xlu0 %487
    %v490 = vadd.f32 %v401, %v488
    %v491 = vadd.f32 %v483, %v221
    %v492 = vtanh.pop %v491
    %s493 = scalar_lea.vmem [#allocation5], 128
    %v494 = vld [vmem:[%s493] sm:$0xff]
    %v495 = vld [vmem:[%s493 + $0x8] sm:$0xff]
    %v496 = vld [vmem:[%s493 + $0x10] sm:$0xff]
    %v497 = vld [vmem:[%s493 + $0x18] sm:$0xff]
    %v498 = vld [vmem:[%s493 + $0x20] sm:$0xff]
    %v499 = vld [vmem:[%s493 + $0x28] sm:$0xff]
    %v500 = vld [vmem:[%s493 + $0x30] sm:$0xff]
    %v501 = vld [vmem:[%s493 + $0x38] sm:$0xff]
    %v503 = vsel %vm323, %v492, 0
    %505 = vmatprep.subr.mxu0 0.0
    %506 = vmatpush1.msra.mxu0 %v494
    %507 = vmatprep.subr.mxu0 0.0
    %508 = vmatpush1.msra.mxu0 %v495
    %509 = vmatprep.subr.mxu0 0.0
    %510 = vmatpush1.msra.mxu0 %v496
    %511 = vmatprep.subr.mxu0 0.0
    %512 = vmatpush1.msra.mxu0 %v497
    %513 = vmatprep.subr.mxu0 0.0
    %514 = vmatpush1.msra.mxu0 %v498
    %515 = vmatprep.subr.mxu0 0.0
    %516 = vmatpush1.msra.mxu0 %v499
    %517 = vmatprep.subr.mxu0 0.0
    %518 = vmatpush1.msra.mxu0 %v500
    %519 = vmatprep.subr.mxu0 0.0
    %520 = vmatpush1.msra.mxu0 %v501
    %521 = vmatprep.subr.mxu0 0.0
    %522 = vmatpush1.msra.mxu0 0.0
    %523 = vmatprep.subr.mxu0 0.0
    %524 = vmatpush1.msra.mxu0 0.0
    %525 = vmatprep.subr.mxu0 0.0
    %526 = vmatpush1.msra.mxu0 0.0
    %527 = vmatprep.subr.mxu0 0.0
    %528 = vmatpush1.msra.mxu0 0.0
    %529 = vmatprep.subr.mxu0 0.0
    %530 = vmatpush1.msra.mxu0 0.0
    %531 = vmatprep.subr.mxu0 0.0
    %532 = vmatpush1.msra.mxu0 0.0
    %533 = vmatprep.subr.mxu0 0.0
    %534 = vmatpush1.msra.mxu0 0.0
    %535 = vmatprep.subr.mxu0 0.0
    %536 = vmatpush1.msra.mxu0 0.0
    %537 = vmatprep.subr.mxu0 0.0
    %538 = vmatpush1.msra.mxu0 0.0
    %539 = vmatprep.subr.mxu0 0.0
    %540 = vmatpush1.msra.mxu0 0.0
    %541 = vmatprep.subr.mxu0 0.0
    %542 = vmatpush1.msra.mxu0 0.0
    %543 = vmatprep.subr.mxu0 0.0
    %544 = vmatpush1.msra.mxu0 0.0
    %545 = vmatprep.subr.mxu0 0.0
    %546 = vmatpush1.msra.mxu0 0.0
    %547 = vmatprep.subr.mxu0 0.0
    %548 = vmatpush1.msra.mxu0 0.0
    %549 = vmatprep.subr.mxu0 0.0
    %550 = vmatpush1.msra.mxu0 0.0
    %551 = vmatprep.subr.mxu0 0.0
    %552 = vmatpush1.msra.mxu0 0.0
    %553 = vmatprep.subr.mxu0 0.0
    %554 = vmatpush1.msra.mxu0 0.0
    %555 = vmatprep.subr.mxu0 0.0
    %556 = vmatpush1.msra.mxu0 0.0
    %557 = vmatprep.subr.mxu0 0.0
    %558 = vmatpush1.msra.mxu0 0.0
    %559 = vmatprep.subr.mxu0 0.0
    %560 = vmatpush1.msra.mxu0 0.0
    %561 = vmatprep.subr.mxu0 0.0
    %562 = vmatpush1.msra.mxu0 0.0
    %563 = vmatprep.subr.mxu0 0.0
    %564 = vmatpush1.msra.mxu0 0.0
    %565 = vmatprep.subr.mxu0 0.0
    %566 = vmatpush1.msra.mxu0 0.0
    %567 = vmatprep.subr.mxu0 0.0
    %568 = vmatpush1.msra.mxu0 0.0
    %569 = vmatprep.mubr.f32.mxu0 0.0
    %570 = vmatmul.mubr.f32.gmra.mrb[0].mxu0 %v503
    %v571 = vpop.f32.mrb[0].mxu0
    %v572 = vadd.f32 0.0, %v571
    %v573 = vpop.f32.mrb[0].mxu0
    %574 = vdwg.mxu0
    %576 = vrot.lane.b32.xlu0 %v572, 64
    %v577 = vpop.permute.xlu0 %576
    %v579 = vadd.f32 %v490, %v577
    %v580 = vadd.f32 %v572, %v222
    %v581 = vtanh.pop %v580
    %s582 = scalar_lea.vmem [#allocation5], 192
    %v583 = vld [vmem:[%s582] sm:$0xff]
    %v584 = vld [vmem:[%s582 + $0x8] sm:$0xff]
    %v585 = vld [vmem:[%s582 + $0x10] sm:$0xff]
    %v586 = vld [vmem:[%s582 + $0x18] sm:$0xff]
    %v587 = vld [vmem:[%s582 + $0x20] sm:$0xff]
    %v588 = vld [vmem:[%s582 + $0x28] sm:$0xff]
    %v589 = vld [vmem:[%s582 + $0x30] sm:$0xff]
    %v590 = vld [vmem:[%s582 + $0x38] sm:$0xff]
    %v592 = vsel %vm323, %v581, 0
    %594 = vmatprep.subr.mxu0 0.0
    %595 = vmatpush1.msra.mxu0 %v583
    %596 = vmatprep.subr.mxu0 0.0
    %597 = vmatpush1.msra.mxu0 %v584
    %598 = vmatprep.subr.mxu0 0.0
    %599 = vmatpush1.msra.mxu0 %v585
    %600 = vmatprep.subr.mxu0 0.0
    %601 = vmatpush1.msra.mxu0 %v586
    %602 = vmatprep.subr.mxu0 0.0
    %603 = vmatpush1.msra.mxu0 %v587
    %604 = vmatprep.subr.mxu0 0.0
    %605 = vmatpush1.msra.mxu0 %v588
    %606 = vmatprep.subr.mxu0 0.0
    %607 = vmatpush1.msra.mxu0 %v589
    %608 = vmatprep.subr.mxu0 0.0
    %609 = vmatpush1.msra.mxu0 %v590
    %610 = vmatprep.subr.mxu0 0.0
    %611 = vmatpush1.msra.mxu0 0.0
    %612 = vmatprep.subr.mxu0 0.0
    %613 = vmatpush1.msra.mxu0 0.0
    %614 = vmatprep.subr.mxu0 0.0
    %615 = vmatpush1.msra.mxu0 0.0
    %616 = vmatprep.subr.mxu0 0.0
    %617 = vmatpush1.msra.mxu0 0.0
    %618 = vmatprep.subr.mxu0 0.0
    %619 = vmatpush1.msra.mxu0 0.0
    %620 = vmatprep.subr.mxu0 0.0
    %621 = vmatpush1.msra.mxu0 0.0
    %622 = vmatprep.subr.mxu0 0.0
    %623 = vmatpush1.msra.mxu0 0.0
    %624 = vmatprep.subr.mxu0 0.0
    %625 = vmatpush1.msra.mxu0 0.0
    %626 = vmatprep.subr.mxu0 0.0
    %627 = vmatpush1.msra.mxu0 0.0
    %628 = vmatprep.subr.mxu0 0.0
    %629 = vmatpush1.msra.mxu0 0.0
    %630 = vmatprep.subr.mxu0 0.0
    %631 = vmatpush1.msra.mxu0 0.0
    %632 = vmatprep.subr.mxu0 0.0
    %633 = vmatpush1.msra.mxu0 0.0
    %634 = vmatprep.subr.mxu0 0.0
    %635 = vmatpush1.msra.mxu0 0.0
    %636 = vmatprep.subr.mxu0 0.0
    %637 = vmatpush1.msra.mxu0 0.0
    %638 = vmatprep.subr.mxu0 0.0
    %639 = vmatpush1.msra.mxu0 0.0
    %640 = vmatprep.subr.mxu0 0.0
    %641 = vmatpush1.msra.mxu0 0.0
    %642 = vmatprep.subr.mxu0 0.0
    %643 = vmatpush1.msra.mxu0 0.0
    %644 = vmatprep.subr.mxu0 0.0
    %645 = vmatpush1.msra.mxu0 0.0
    %646 = vmatprep.subr.mxu0 0.0
    %647 = vmatpush1.msra.mxu0 0.0
    %648 = vmatprep.subr.mxu0 0.0
    %649 = vmatpush1.msra.mxu0 0.0
    %650 = vmatprep.subr.mxu0 0.0
    %651 = vmatpush1.msra.mxu0 0.0
    %652 = vmatprep.subr.mxu0 0.0
    %653 = vmatpush1.msra.mxu0 0.0
    %654 = vmatprep.subr.mxu0 0.0
    %655 = vmatpush1.msra.mxu0 0.0
    %656 = vmatprep.subr.mxu0 0.0
    %657 = vmatpush1.msra.mxu0 0.0
    %658 = vmatprep.mubr.f32.mxu0 0.0
    %659 = vmatmul.mubr.f32.gmra.mrb[0].mxu0 %v592
    %v660 = vpop.f32.mrb[0].mxu0
    %v661 = vadd.f32 0.0, %v660
    %v662 = vpop.f32.mrb[0].mxu0
    %663 = vdwg.mxu0
    %665 = vrot.lane.b32.xlu0 %v661, 64
    %v666 = vpop.permute.xlu0 %665
    %v668 = vadd.f32 %v579, %v666
    %v669 = vadd.f32 %v661, %v223
    %v670 = vtanh.pop %v669
    %s671 = scalar_lea.vmem [#allocation5], 256
    %v672 = vld [vmem:[%s671] sm:$0xff]
    %v673 = vld [vmem:[%s671 + $0x8] sm:$0xff]
    %v674 = vld [vmem:[%s671 + $0x10] sm:$0xff]
    %v675 = vld [vmem:[%s671 + $0x18] sm:$0xff]
    %v676 = vld [vmem:[%s671 + $0x20] sm:$0xff]
    %v677 = vld [vmem:[%s671 + $0x28] sm:$0xff]
    %v678 = vld [vmem:[%s671 + $0x30] sm:$0xff]
    %v679 = vld [vmem:[%s671 + $0x38] sm:$0xff]
    %v681 = vsel %vm323, %v670, 0
    %683 = vmatprep.subr.mxu0 0.0
    %684 = vmatpush1.msra.mxu0 %v672
    %685 = vmatprep.subr.mxu0 0.0
    %686 = vmatpush1.msra.mxu0 %v673
    %687 = vmatprep.subr.mxu0 0.0
    %688 = vmatpush1.msra.mxu0 %v674
    %689 = vmatprep.subr.mxu0 0.0
    %690 = vmatpush1.msra.mxu0 %v675
    %691 = vmatprep.subr.mxu0 0.0
    %692 = vmatpush1.msra.mxu0 %v676
    %693 = vmatprep.subr.mxu0 0.0
    %694 = vmatpush1.msra.mxu0 %v677
    %695 = vmatprep.subr.mxu0 0.0
    %696 = vmatpush1.msra.mxu0 %v678
    %697 = vmatprep.subr.mxu0 0.0
    %698 = vmatpush1.msra.mxu0 %v679
    %699 = vmatprep.subr.mxu0 0.0
    %700 = vmatpush1.msra.mxu0 0.0
    %701 = vmatprep.subr.mxu0 0.0
    %702 = vmatpush1.msra.mxu0 0.0
    %703 = vmatprep.subr.mxu0 0.0
    %704 = vmatpush1.msra.mxu0 0.0
    %705 = vmatprep.subr.mxu0 0.0
    %706 = vmatpush1.msra.mxu0 0.0
    %707 = vmatprep.subr.mxu0 0.0
    %708 = vmatpush1.msra.mxu0 0.0
    %709 = vmatprep.subr.mxu0 0.0
    %710 = vmatpush1.msra.mxu0 0.0
    %711 = vmatprep.subr.mxu0 0.0
    %712 = vmatpush1.msra.mxu0 0.0
    %713 = vmatprep.subr.mxu0 0.0
    %714 = vmatpush1.msra.mxu0 0.0
    %715 = vmatprep.subr.mxu0 0.0
    %716 = vmatpush1.msra.mxu0 0.0
    %717 = vmatprep.subr.mxu0 0.0
    %718 = vmatpush1.msra.mxu0 0.0
    %719 = vmatprep.subr.mxu0 0.0
    %720 = vmatpush1.msra.mxu0 0.0
    %721 = vmatprep.subr.mxu0 0.0
    %722 = vmatpush1.msra.mxu0 0.0
    %723 = vmatprep.subr.mxu0 0.0
    %724 = vmatpush1.msra.mxu0 0.0
    %725 = vmatprep.subr.mxu0 0.0
    %726 = vmatpush1.msra.mxu0 0.0
    %727 = vmatprep.subr.mxu0 0.0
    %728 = vmatpush1.msra.mxu0 0.0
    %729 = vmatprep.subr.mxu0 0.0
    %730 = vmatpush1.msra.mxu0 0.0
    %731 = vmatprep.subr.mxu0 0.0
    %732 = vmatpush1.msra.mxu0 0.0
    %733 = vmatprep.subr.mxu0 0.0
    %734 = vmatpush1.msra.mxu0 0.0
    %735 = vmatprep.subr.mxu0 0.0
    %736 = vmatpush1.msra.mxu0 0.0
    %737 = vmatprep.subr.mxu0 0.0
    %738 = vmatpush1.msra.mxu0 0.0
    %739 = vmatprep.subr.mxu0 0.0
    %740 = vmatpush1.msra.mxu0 0.0
    %741 = vmatprep.subr.mxu0 0.0
    %742 = vmatpush1.msra.mxu0 0.0
    %743 = vmatprep.subr.mxu0 0.0
    %744 = vmatpush1.msra.mxu0 0.0
    %745 = vmatprep.subr.mxu0 0.0
    %746 = vmatpush1.msra.mxu0 0.0
    %747 = vmatprep.mubr.f32.mxu0 0.0
    %748 = vmatmul.mubr.f32.gmra.mrb[0].mxu0 %v681
    %v749 = vpop.f32.mrb[0].mxu0
    %v750 = vadd.f32 0.0, %v749
    %v751 = vpop.f32.mrb[0].mxu0
    %752 = vdwg.mxu0
    %754 = vrot.lane.b32.xlu0 %v750, 64
    %v755 = vpop.permute.xlu0 %754
    %v757 = vadd.f32 %v668, %v755
    %v758 = vadd.f32 %v750, %v224
    %v759 = vtanh.pop %v758
    %s760 = scalar_lea.vmem [#allocation5], 320
    %v761 = vld [vmem:[%s760] sm:$0xff]
    %v762 = vld [vmem:[%s760 + $0x8] sm:$0xff]
    %v763 = vld [vmem:[%s760 + $0x10] sm:$0xff]
    %v764 = vld [vmem:[%s760 + $0x18] sm:$0xff]
    %v765 = vld [vmem:[%s760 + $0x20] sm:$0xff]
    %v766 = vld [vmem:[%s760 + $0x28] sm:$0xff]
    %v767 = vld [vmem:[%s760 + $0x30] sm:$0xff]
    %v768 = vld [vmem:[%s760 + $0x38] sm:$0xff]
    %v770 = vsel %vm323, %v759, 0
    %772 = vmatprep.subr.mxu0 0.0
    %773 = vmatpush1.msra.mxu0 %v761
    %774 = vmatprep.subr.mxu0 0.0
    %775 = vmatpush1.msra.mxu0 %v762
    %776 = vmatprep.subr.mxu0 0.0
    %777 = vmatpush1.msra.mxu0 %v763
    %778 = vmatprep.subr.mxu0 0.0
    %779 = vmatpush1.msra.mxu0 %v764
    %780 = vmatprep.subr.mxu0 0.0
    %781 = vmatpush1.msra.mxu0 %v765
    %782 = vmatprep.subr.mxu0 0.0
    %783 = vmatpush1.msra.mxu0 %v766
    %784 = vmatprep.subr.mxu0 0.0
    %785 = vmatpush1.msra.mxu0 %v767
    %786 = vmatprep.subr.mxu0 0.0
    %787 = vmatpush1.msra.mxu0 %v768
    %788 = vmatprep.subr.mxu0 0.0
    %789 = vmatpush1.msra.mxu0 0.0
    %790 = vmatprep.subr.mxu0 0.0
    %791 = vmatpush1.msra.mxu0 0.0
    %792 = vmatprep.subr.mxu0 0.0
    %793 = vmatpush1.msra.mxu0 0.0
    %794 = vmatprep.subr.mxu0 0.0
    %795 = vmatpush1.msra.mxu0 0.0
    %796 = vmatprep.subr.mxu0 0.0
    %797 = vmatpush1.msra.mxu0 0.0
    %798 = vmatprep.subr.mxu0 0.0
    %799 = vmatpush1.msra.mxu0 0.0
    %800 = vmatprep.subr.mxu0 0.0
    %801 = vmatpush1.msra.mxu0 0.0
    %802 = vmatprep.subr.mxu0 0.0
    %803 = vmatpush1.msra.mxu0 0.0
    %804 = vmatprep.subr.mxu0 0.0
    %805 = vmatpush1.msra.mxu0 0.0
    %806 = vmatprep.subr.mxu0 0.0
    %807 = vmatpush1.msra.mxu0 0.0
    %808 = vmatprep.subr.mxu0 0.0
    %809 = vmatpush1.msra.mxu0 0.0
    %810 = vmatprep.subr.mxu0 0.0
    %811 = vmatpush1.msra.mxu0 0.0
    %812 = vmatprep.subr.mxu0 0.0
    %813 = vmatpush1.msra.mxu0 0.0
    %814 = vmatprep.subr.mxu0 0.0
    %815 = vmatpush1.msra.mxu0 0.0
    %816 = vmatprep.subr.mxu0 0.0
    %817 = vmatpush1.msra.mxu0 0.0
    %818 = vmatprep.subr.mxu0 0.0
    %819 = vmatpush1.msra.mxu0 0.0
    %820 = vmatprep.subr.mxu0 0.0
    %821 = vmatpush1.msra.mxu0 0.0
    %822 = vmatprep.subr.mxu0 0.0
    %823 = vmatpush1.msra.mxu0 0.0
    %824 = vmatprep.subr.mxu0 0.0
    %825 = vmatpush1.msra.mxu0 0.0
    %826 = vmatprep.subr.mxu0 0.0
    %827 = vmatpush1.msra.mxu0 0.0
    %828 = vmatprep.subr.mxu0 0.0
    %829 = vmatpush1.msra.mxu0 0.0
    %830 = vmatprep.subr.mxu0 0.0
    %831 = vmatpush1.msra.mxu0 0.0
    %832 = vmatprep.subr.mxu0 0.0
    %833 = vmatpush1.msra.mxu0 0.0
    %834 = vmatprep.subr.mxu0 0.0
    %835 = vmatpush1.msra.mxu0 0.0
    %836 = vmatprep.mubr.f32.mxu0 0.0
    %837 = vmatmul.mubr.f32.gmra.mrb[0].mxu0 %v770
    %v838 = vpop.f32.mrb[0].mxu0
    %v839 = vadd.f32 0.0, %v838
    %v840 = vpop.f32.mrb[0].mxu0
    %841 = vdwg.mxu0
    %843 = vrot.lane.b32.xlu0 %v839, 64
    %v844 = vpop.permute.xlu0 %843
    %v846 = vadd.f32 %v757, %v844
    %v847 = vadd.f32 %v839, %v225
    %v848 = vtanh.pop %v847
    %s849 = scalar_lea.vmem [#allocation5], 384
    %v850 = vld [vmem:[%s849] sm:$0xff]
    %v851 = vld [vmem:[%s849 + $0x8] sm:$0xff]
    %v852 = vld [vmem:[%s849 + $0x10] sm:$0xff]
    %v853 = vld [vmem:[%s849 + $0x18] sm:$0xff]
    %v854 = vld [vmem:[%s849 + $0x20] sm:$0xff]
    %v855 = vld [vmem:[%s849 + $0x28] sm:$0xff]
    %v856 = vld [vmem:[%s849 + $0x30] sm:$0xff]
    %v857 = vld [vmem:[%s849 + $0x38] sm:$0xff]
    %v859 = vsel %vm323, %v848, 0
    %861 = vmatprep.subr.mxu0 0.0
    %862 = vmatpush1.msra.mxu0 %v850
    %863 = vmatprep.subr.mxu0 0.0
    %864 = vmatpush1.msra.mxu0 %v851
    %865 = vmatprep.subr.mxu0 0.0
    %866 = vmatpush1.msra.mxu0 %v852
    %867 = vmatprep.subr.mxu0 0.0
    %868 = vmatpush1.msra.mxu0 %v853
    %869 = vmatprep.subr.mxu0 0.0
    %870 = vmatpush1.msra.mxu0 %v854
    %871 = vmatprep.subr.mxu0 0.0
    %872 = vmatpush1.msra.mxu0 %v855
    %873 = vmatprep.subr.mxu0 0.0
    %874 = vmatpush1.msra.mxu0 %v856
    %875 = vmatprep.subr.mxu0 0.0
    %876 = vmatpush1.msra.mxu0 %v857
    %877 = vmatprep.subr.mxu0 0.0
    %878 = vmatpush1.msra.mxu0 0.0
    %879 = vmatprep.subr.mxu0 0.0
    %880 = vmatpush1.msra.mxu0 0.0
    %881 = vmatprep.subr.mxu0 0.0
    %882 = vmatpush1.msra.mxu0 0.0
    %883 = vmatprep.subr.mxu0 0.0
    %884 = vmatpush1.msra.mxu0 0.0
    %885 = vmatprep.subr.mxu0 0.0
    %886 = vmatpush1.msra.mxu0 0.0
    %887 = vmatprep.subr.mxu0 0.0
    %888 = vmatpush1.msra.mxu0 0.0
    %889 = vmatprep.subr.mxu0 0.0
    %890 = vmatpush1.msra.mxu0 0.0
    %891 = vmatprep.subr.mxu0 0.0
    %892 = vmatpush1.msra.mxu0 0.0
    %893 = vmatprep.subr.mxu0 0.0
    %894 = vmatpush1.msra.mxu0 0.0
    %895 = vmatprep.subr.mxu0 0.0
    %896 = vmatpush1.msra.mxu0 0.0
    %897 = vmatprep.subr.mxu0 0.0
    %898 = vmatpush1.msra.mxu0 0.0
    %899 = vmatprep.subr.mxu0 0.0
    %900 = vmatpush1.msra.mxu0 0.0
    %901 = vmatprep.subr.mxu0 0.0
    %902 = vmatpush1.msra.mxu0 0.0
    %903 = vmatprep.subr.mxu0 0.0
    %904 = vmatpush1.msra.mxu0 0.0
    %905 = vmatprep.subr.mxu0 0.0
    %906 = vmatpush1.msra.mxu0 0.0
    %907 = vmatprep.subr.mxu0 0.0
    %908 = vmatpush1.msra.mxu0 0.0
    %909 = vmatprep.subr.mxu0 0.0
    %910 = vmatpush1.msra.mxu0 0.0
    %911 = vmatprep.subr.mxu0 0.0
    %912 = vmatpush1.msra.mxu0 0.0
    %913 = vmatprep.subr.mxu0 0.0
    %914 = vmatpush1.msra.mxu0 0.0
    %915 = vmatprep.subr.mxu0 0.0
    %916 = vmatpush1.msra.mxu0 0.0
    %917 = vmatprep.subr.mxu0 0.0
    %918 = vmatpush1.msra.mxu0 0.0
    %919 = vmatprep.subr.mxu0 0.0
    %920 = vmatpush1.msra.mxu0 0.0
    %921 = vmatprep.subr.mxu0 0.0
    %922 = vmatpush1.msra.mxu0 0.0
    %923 = vmatprep.subr.mxu0 0.0
    %924 = vmatpush1.msra.mxu0 0.0
    %925 = vmatprep.mubr.f32.mxu0 0.0
    %926 = vmatmul.mubr.f32.gmra.mrb[0].mxu0 %v859
    %v927 = vpop.f32.mrb[0].mxu0
    %v928 = vadd.f32 0.0, %v927
    %v929 = vpop.f32.mrb[0].mxu0
    %930 = vdwg.mxu0
    %932 = vrot.lane.b32.xlu0 %v928, 64
    %v933 = vpop.permute.xlu0 %932
    %v935 = vadd.f32 %v846, %v933
    %v936 = vadd.f32 %v928, %v226
    %v937 = vtanh.pop %v936
    %v938 = vld [vmem:[%s5] sm:$0xff]
    %v939 = vld [vmem:[%s5 + $0x8] sm:$0xff]
    %v940 = vld [vmem:[%s5 + $0x10] sm:$0xff]
    %v941 = vld [vmem:[%s5 + $0x18] sm:$0xff]
    %v942 = vld [vmem:[%s5 + $0x20] sm:$0xff]
    %v943 = vld [vmem:[%s5 + $0x28] sm:$0xff]
    %v944 = vld [vmem:[%s5 + $0x30] sm:$0xff]
    %v945 = vld [vmem:[%s5 + $0x38] sm:$0xff]
    %v947 = vsel %vm323, %v937, 0
    %949 = vmatprep.subr.mxu0 0.0
    %950 = vmatpush1.msra.mxu0 %v938
    %951 = vmatprep.subr.mxu0 0.0
    %952 = vmatpush1.msra.mxu0 %v939
    %953 = vmatprep.subr.mxu0 0.0
    %954 = vmatpush1.msra.mxu0 %v940
    %955 = vmatprep.subr.mxu0 0.0
    %956 = vmatpush1.msra.mxu0 %v941
    %957 = vmatprep.subr.mxu0 0.0
    %958 = vmatpush1.msra.mxu0 %v942
    %959 = vmatprep.subr.mxu0 0.0
    %960 = vmatpush1.msra.mxu0 %v943
    %961 = vmatprep.subr.mxu0 0.0
    %962 = vmatpush1.msra.mxu0 %v944
    %963 = vmatprep.subr.mxu0 0.0
    %964 = vmatpush1.msra.mxu0 %v945
    %965 = vmatprep.subr.mxu0 0.0
    %966 = vmatpush1.msra.mxu0 0.0
    %967 = vmatprep.subr.mxu0 0.0
    %968 = vmatpush1.msra.mxu0 0.0
    %969 = vmatprep.subr.mxu0 0.0
    %970 = vmatpush1.msra.mxu0 0.0
    %971 = vmatprep.subr.mxu0 0.0
    %972 = vmatpush1.msra.mxu0 0.0
    %973 = vmatprep.subr.mxu0 0.0
    %974 = vmatpush1.msra.mxu0 0.0
    %975 = vmatprep.subr.mxu0 0.0
    %976 = vmatpush1.msra.mxu0 0.0
    %977 = vmatprep.subr.mxu0 0.0
    %978 = vmatpush1.msra.mxu0 0.0
    %979 = vmatprep.subr.mxu0 0.0
    %980 = vmatpush1.msra.mxu0 0.0
    %981 = vmatprep.subr.mxu0 0.0
    %982 = vmatpush1.msra.mxu0 0.0
    %983 = vmatprep.subr.mxu0 0.0
    %984 = vmatpush1.msra.mxu0 0.0
    %985 = vmatprep.subr.mxu0 0.0
    %986 = vmatpush1.msra.mxu0 0.0
    %987 = vmatprep.subr.mxu0 0.0
    %988 = vmatpush1.msra.mxu0 0.0
    %989 = vmatprep.subr.mxu0 0.0
    %990 = vmatpush1.msra.mxu0 0.0
    %991 = vmatprep.subr.mxu0 0.0
    %992 = vmatpush1.msra.mxu0 0.0
    %993 = vmatprep.subr.mxu0 0.0
    %994 = vmatpush1.msra.mxu0 0.0
    %995 = vmatprep.subr.mxu0 0.0
    %996 = vmatpush1.msra.mxu0 0.0
    %997 = vmatprep.subr.mxu0 0.0
    %998 = vmatpush1.msra.mxu0 0.0
    %999 = vmatprep.subr.mxu0 0.0
    %1000 = vmatpush1.msra.mxu0 0.0
    %1001 = vmatprep.subr.mxu0 0.0
    %1002 = vmatpush1.msra.mxu0 0.0
    %1003 = vmatprep.subr.mxu0 0.0
    %1004 = vmatpush1.msra.mxu0 0.0
    %1005 = vmatprep.subr.mxu0 0.0
    %1006 = vmatpush1.msra.mxu0 0.0
    %1007 = vmatprep.subr.mxu0 0.0
    %1008 = vmatpush1.msra.mxu0 0.0
    %1009 = vmatprep.subr.mxu0 0.0
    %1010 = vmatpush1.msra.mxu0 0.0
    %1011 = vmatprep.subr.mxu0 0.0
    %1012 = vmatpush1.msra.mxu0 0.0
    %1013 = vmatprep.mubr.f32.mxu0 0.0
    %1014 = vmatmul.mubr.f32.gmra.mrb[0].mxu0 %v947
    %v1015 = vpop.f32.mrb[0].mxu0
    %v1016 = vadd.f32 0.0, %v1015
    %v1017 = vpop.f32.mrb[0].mxu0
    %1018 = vdwg.mxu0
    %v1019 = vadd.f32 %v935, %v1016
    %v1020 = vmax.f32 %v1019, 0.0
    %v1021 = vld [vmem:[%s8] sm:$0xff]
    %v1022 = vld [vmem:[%s8 + $0x8] sm:$0xff]
    %v1023 = vld [vmem:[%s8 + $0x10] sm:$0xff]
    %v1024 = vld [vmem:[%s8 + $0x18] sm:$0xff]
    %v1025 = vld [vmem:[%s8 + $0x20] sm:$0xff]
    %v1026 = vld [vmem:[%s8 + $0x28] sm:$0xff]
    %v1027 = vld [vmem:[%s8 + $0x30] sm:$0xff]
    %v1028 = vld [vmem:[%s8 + $0x38] sm:$0xff]
    %v1029 = vld [vmem:[%s9] sm:$0x1]
    %v1031 = vlaneseq
    %v1032 = vshrl.u32 %v1031, 7
    %v1033 = vsub.s32 0, %v1032
    %v1034 = vrot.slane %v1029, %v1033
    %v1037 = vsel %vm323, %v1020, 0
    %1039 = vmatprep.subr.mxu0 0.0
    %1040 = vmatpush1.msra.mxu0 %v1021
    %1041 = vmatprep.subr.mxu0 0.0
    %1042 = vmatpush1.msra.mxu0 %v1022
    %1043 = vmatprep.subr.mxu0 0.0
    %1044 = vmatpush1.msra.mxu0 %v1023
    %1045 = vmatprep.subr.mxu0 0.0
    %1046 = vmatpush1.msra.mxu0 %v1024
    %1047 = vmatprep.subr.mxu0 0.0
    %1048 = vmatpush1.msra.mxu0 %v1025
    %1049 = vmatprep.subr.mxu0 0.0
    %1050 = vmatpush1.msra.mxu0 %v1026
    %1051 = vmatprep.subr.mxu0 0.0
    %1052 = vmatpush1.msra.mxu0 %v1027
    %1053 = vmatprep.subr.mxu0 0.0
    %1054 = vmatpush1.msra.mxu0 %v1028
    %1055 = vmatprep.subr.mxu0 0.0
    %1056 = vmatpush1.msra.mxu0 0.0
    %1057 = vmatprep.subr.mxu0 0.0
    %1058 = vmatpush1.msra.mxu0 0.0
    %1059 = vmatprep.subr.mxu0 0.0
    %1060 = vmatpush1.msra.mxu0 0.0
    %1061 = vmatprep.subr.mxu0 0.0
    %1062 = vmatpush1.msra.mxu0 0.0
    %1063 = vmatprep.subr.mxu0 0.0
    %1064 = vmatpush1.msra.mxu0 0.0
    %1065 = vmatprep.subr.mxu0 0.0
    %1066 = vmatpush1.msra.mxu0 0.0
    %1067 = vmatprep.subr.mxu0 0.0
    %1068 = vmatpush1.msra.mxu0 0.0
    %1069 = vmatprep.subr.mxu0 0.0
    %1070 = vmatpush1.msra.mxu0 0.0
    %1071 = vmatprep.subr.mxu0 0.0
    %1072 = vmatpush1.msra.mxu0 0.0
    %1073 = vmatprep.subr.mxu0 0.0
    %1074 = vmatpush1.msra.mxu0 0.0
    %1075 = vmatprep.subr.mxu0 0.0
    %1076 = vmatpush1.msra.mxu0 0.0
    %1077 = vmatprep.subr.mxu0 0.0
    %1078 = vmatpush1.msra.mxu0 0.0
    %1079 = vmatprep.subr.mxu0 0.0
    %1080 = vmatpush1.msra.mxu0 0.0
    %1081 = vmatprep.subr.mxu0 0.0
    %1082 = vmatpush1.msra.mxu0 0.0
    %1083 = vmatprep.subr.mxu0 0.0
    %1084 = vmatpush1.msra.mxu0 0.0
    %1085 = vmatprep.subr.mxu0 0.0
    %1086 = vmatpush1.msra.mxu0 0.0
    %1087 = vmatprep.subr.mxu0 0.0
    %1088 = vmatpush1.msra.mxu0 0.0
    %1089 = vmatprep.subr.mxu0 0.0
    %1090 = vmatpush1.msra.mxu0 0.0
    %1091 = vmatprep.subr.mxu0 0.0
    %1092 = vmatpush1.msra.mxu0 0.0
    %1093 = vmatprep.subr.mxu0 0.0
    %1094 = vmatpush1.msra.mxu0 0.0
    %1095 = vmatprep.subr.mxu0 0.0
    %1096 = vmatpush1.msra.mxu0 0.0
    %1097 = vmatprep.subr.mxu0 0.0
    %1098 = vmatpush1.msra.mxu0 0.0
    %1099 = vmatprep.subr.mxu0 0.0
    %1100 = vmatpush1.msra.mxu0 0.0
    %1101 = vmatprep.subr.mxu0 0.0
    %1102 = vmatpush1.msra.mxu0 0.0
    %1103 = vmatprep.mubr.f32.mxu0 0.0
    %1104 = vmatmul.mubr.f32.gmra.mrb[0].mxu0 %v1037
    %v1105 = vpop.f32.mrb[0].mxu0
    %v1106 = vadd.f32 %v1034, %v1105
    %v1107 = vpop.f32.mrb[0].mxu0
    %1108 = vdwg.mxu0
    %v1109 = vmax.f32 %v1106, 0.0
    %v1110 = vld [vmem:[%s10] sm:$0xff]
    %v1111 = vld [vmem:[%s10 + $0x8] sm:$0xff]
    %v1112 = vld [vmem:[%s10 + $0x10] sm:$0xff]
    %v1113 = vld [vmem:[%s10 + $0x18] sm:$0xff]
    %v1114 = vld [vmem:[#allocation2] sm:$0x1]
    %v1116 = vlaneseq
    %v1117 = vshrl.u32 %v1116, 7
    %v1118 = vsub.s32 0, %v1117
    %v1119 = vrot.slane %v1114, %v1118
    %v1122 = vsel %vm218, %v1109, 0
    %1124 = vmatprep.subr.mxu0 0.0
    %1125 = vmatpush1.msra.mxu0 %v1110
    %1126 = vmatprep.subr.mxu0 0.0
    %1127 = vmatpush1.msra.mxu0 %v1111
    %1128 = vmatprep.subr.mxu0 0.0
    %1129 = vmatpush1.msra.mxu0 %v1112
    %1130 = vmatprep.subr.mxu0 0.0
    %1131 = vmatpush1.msra.mxu0 %v1113
    %1132 = vmatprep.subr.mxu0 0.0
    %1133 = vmatpush1.msra.mxu0 0.0
    %1134 = vmatprep.subr.mxu0 0.0
    %1135 = vmatpush1.msra.mxu0 0.0
    %1136 = vmatprep.subr.mxu0 0.0
    %1137 = vmatpush1.msra.mxu0 0.0
    %1138 = vmatprep.subr.mxu0 0.0
    %1139 = vmatpush1.msra.mxu0 0.0
    %1140 = vmatprep.subr.mxu0 0.0
    %1141 = vmatpush1.msra.mxu0 0.0
    %1142 = vmatprep.subr.mxu0 0.0
    %1143 = vmatpush1.msra.mxu0 0.0
    %1144 = vmatprep.subr.mxu0 0.0
    %1145 = vmatpush1.msra.mxu0 0.0
    %1146 = vmatprep.subr.mxu0 0.0
    %1147 = vmatpush1.msra.mxu0 0.0
    %1148 = vmatprep.subr.mxu0 0.0
    %1149 = vmatpush1.msra.mxu0 0.0
    %1150 = vmatprep.subr.mxu0 0.0
    %1151 = vmatpush1.msra.mxu0 0.0
    %1152 = vmatprep.subr.mxu0 0.0
    %1153 = vmatpush1.msra.mxu0 0.0
    %1154 = vmatprep.subr.mxu0 0.0
    %1155 = vmatpush1.msra.mxu0 0.0
    %1156 = vmatprep.subr.mxu0 0.0
    %1157 = vmatpush1.msra.mxu0 0.0
    %1158 = vmatprep.subr.mxu0 0.0
    %1159 = vmatpush1.msra.mxu0 0.0
    %1160 = vmatprep.subr.mxu0 0.0
    %1161 = vmatpush1.msra.mxu0 0.0
    %1162 = vmatprep.subr.mxu0 0.0
    %1163 = vmatpush1.msra.mxu0 0.0
    %1164 = vmatprep.subr.mxu0 0.0
    %1165 = vmatpush1.msra.mxu0 0.0
    %1166 = vmatprep.subr.mxu0 0.0
    %1167 = vmatpush1.msra.mxu0 0.0
    %1168 = vmatprep.subr.mxu0 0.0
    %1169 = vmatpush1.msra.mxu0 0.0
    %1170 = vmatprep.subr.mxu0 0.0
    %1171 = vmatpush1.msra.mxu0 0.0
    %1172 = vmatprep.subr.mxu0 0.0
    %1173 = vmatpush1.msra.mxu0 0.0
    %1174 = vmatprep.subr.mxu0 0.0
    %1175 = vmatpush1.msra.mxu0 0.0
    %1176 = vmatprep.subr.mxu0 0.0
    %1177 = vmatpush1.msra.mxu0 0.0
    %1178 = vmatprep.subr.mxu0 0.0
    %1179 = vmatpush1.msra.mxu0 0.0
    %1180 = vmatprep.subr.mxu0 0.0
    %1181 = vmatpush1.msra.mxu0 0.0
    %1182 = vmatprep.subr.mxu0 0.0
    %1183 = vmatpush1.msra.mxu0 0.0
    %1184 = vmatprep.subr.mxu0 0.0
    %1185 = vmatpush1.msra.mxu0 0.0
    %1186 = vmatprep.subr.mxu0 0.0
    %1187 = vmatpush1.msra.mxu0 0.0
    %1188 = vmatprep.mubr.f32.mxu0 0.0
    %1189 = vmatmul.mubr.f32.gmra.mrb[0].mxu0 %v1122
    %v1190 = vpop.f32.mrb[0].mxu0
    %v1191 = vadd.f32 %v1119, %v1190
    %v1192 = vpop.f32.mrb[0].mxu0
    %1193 = vdwg.mxu0
    %vm1194 = vcmask 7168
    %1195 = vst.msk [vmem:[%s12] sm:$0xff] %vm1194, %v1191
    // Predicated region
    $region58: #{tpu_custom_call.1} parent=1 // pred_check
      _
    $region59: #{tpu_custom_call.1} parent=1 // pred_check_branch
      %1197 = sbr.rel (0) target = $region61
    $region60: #{tpu_custom_call.1} parent=1 // pred_region
      _
    $region61: #{tpu_custom_call.1} parent=1 // pred_fallthru
      _
    // Predicated region
    $region62: #{tpu_custom_call.1} parent=1 // pred_check
      _
    $region63: #{tpu_custom_call.1} parent=1 // pred_check_branch
      %1199 = sbr.rel (0) target = $region65
    $region64: #{tpu_custom_call.1} parent=1 // pred_region
      _
    $region65: #{tpu_custom_call.1} parent=1 // pred_fallthru
      _
    %1200 = vsyncpa [#allocation4], 1
    %1201 = vsyncpa [#allocation6], 1

</llo_original>
